<compile_context>
chip_gen: v7x
topology: tpu7x:2x2x1
jax: 0.10.0
libtpu: 0.0.40
codegen_flags: <defaults>
</compile_context>

<pallas_src>
import math
import jax
import jax.numpy as jnp
from jax import lax
from jax.experimental import pallas as pl
from jax.experimental.pallas import tpu as pltpu

# Python-float constants only: module-level jnp scalars would be captured as kernel
# constants and break pallas_call tracing ("captures constants [f32[]]").
_LN_EPS = 1e-5
_NEG_INF = -1e9
_VMEM_LIMIT = 64 * 1024 * 1024


# ----------------------------------------------------------------------------
# in-kernel helpers
# ----------------------------------------------------------------------------

def _layer_norm(x, gamma, beta):
    mean = jnp.mean(x, axis=-1, keepdims=True)
    var = jnp.mean(jnp.square(x - mean), axis=-1, keepdims=True)
    return (x - mean) * lax.rsqrt(var + _LN_EPS) * gamma + beta


def _attend(xn_bf, wq_ref, bq_ref, k_bf, v_bf, wo_ref, bo_ref, keep_mask, num_heads):
    """MHA of a bf16 (Tq, D) query slab against cached bf16 K/V slabs (Tk, D).

    Full-width Q projection and a single full-width output projection; only the
    (Tq,Tk) score and P*V dots are per-head (static unroll).  `keep_mask` is None
    or a boolean (1,Tk)/(Tq,Tk) array broadcast against the scores.
    """
    D = xn_bf.shape[-1]
    dh = D // num_heads
    scale = 1.0 / math.sqrt(dh)

    q = jnp.dot(xn_bf, wq_ref[...], preferred_element_type=jnp.float32) + bq_ref[...]

    ctx_parts = []
    for h in range(num_heads):                                  # static unroll
        lo, hi = h * dh, (h + 1) * dh
        q_h = q[:, lo:hi].astype(jnp.bfloat16)
        # contract last dims directly -- no .T / XLU transpose per head
        s = lax.dot_general(q_h, k_bf[:, lo:hi], (((1,), (1,)), ((), ())),
                            preferred_element_type=jnp.float32) * scale
        if keep_mask is not None:
            s = jnp.where(keep_mask, s, _NEG_INF)
        s = s - jnp.max(s, axis=-1, keepdims=True)
        p = jnp.exp(s)
        p = p / jnp.sum(p, axis=-1, keepdims=True)              # exact softmax
        ctx_parts.append(jnp.dot(p.astype(jnp.bfloat16), v_bf[:, lo:hi],
                                 preferred_element_type=jnp.float32))
    ctx = jnp.concatenate(ctx_parts, axis=-1)                   # (Tq, H*dh) contiguous
    return jnp.dot(ctx.astype(jnp.bfloat16), wo_ref[...],
                   preferred_element_type=jnp.float32) + bo_ref[...]


# ----------------------------------------------------------------------------
# Pallas kernels
# ----------------------------------------------------------------------------

def make_self_attention_kernel(num_heads, tq):
    """LayerNorm -> causal self-MHA -> out-proj -> +residual, fused. Grid (B, nq)."""
    def kernel(x_ref, gamma_ref, beta_ref,
               wq_ref, bq_ref, wk_ref, bk_ref, wv_ref, bv_ref, wo_ref, bo_ref,
               out_ref, xn_sc, k_sc, v_sc):
        T = x_ref.shape[1]
        qi = pl.program_id(1)

        # LN + K/V projections computed once per batch element, reused across q tiles.
        @pl.when(qi == 0)
        def _():
            xn = _layer_norm(x_ref[0].astype(jnp.float32), gamma_ref[...], beta_ref[...])
            xn_b = xn.astype(jnp.bfloat16)
            xn_sc[...] = xn_b
            k_sc[...] = (jnp.dot(xn_b, wk_ref[...], preferred_element_type=jnp.float32)
                         + bk_ref[...]).astype(jnp.bfloat16)
            v_sc[...] = (jnp.dot(xn_b, wv_ref[...], preferred_element_type=jnp.float32)
                         + bv_ref[...]).astype(jnp.bfloat16)

        row0 = pl.multiple_of(qi * tq, tq)
        x_tile = x_ref[0, pl.ds(row0, tq), :].astype(jnp.float32)   # residual rows (f32)
        xn_tile = xn_sc[pl.ds(row0, tq), :]                         # LN(x) rows (bf16)

        # causal keep-mask generated in-kernel: no [B,T,T] HBM mask traffic.
        rows = row0 + lax.broadcasted_iota(jnp.int32, (tq, T), 0)
        cols = lax.broadcasted_iota(jnp.int32, (tq, T), 1)
        causal = cols <= rows

        att = _attend(xn_tile, wq_ref, bq_ref, k_sc[...], v_sc[...],
                      wo_ref, bo_ref, causal, num_heads)
        out_ref[0] = (x_tile + att).astype(out_ref.dtype)
    return kernel


def make_cross_fuse_kernel(num_heads, has_mask):
    """Two cross-attentions from LN(captions) + the _fuse_gate, fused. Grid (B, nq).

    The (con, sen) attention outputs never leave VMEM before the gate; K/V
    projections are cached in VMEM scratch once per batch element.
    """
    def kernel(*refs):
        if has_mask:
            (cap_ref, kv_a_ref, kv_b_ref, mask_ref), rest = refs[:4], refs[4:]
        else:
            (cap_ref, kv_a_ref, kv_b_ref), rest = refs[:3], refs[3:]
            mask_ref = None
        (ga_ref, bta_ref, gb_ref, btb_ref,
         wqa, bqa, wka, bka, wva, bva, woa, boa,
         wqb, bqb, wkb, bkb, wvb, bvb, wob, bob,
         out_ref, scores_ref, ka_sc, va_sc, kb_sc, vb_sc) = rest

        qi = pl.program_id(1)

        @pl.when(qi == 0)
        def _():
            kva = kv_a_ref[0]                                        # bf16 (Tk, D)
            kvb = kv_b_ref[0]
            ka_sc[...] = (jnp.dot(kva, wka[...], preferred_element_type=jnp.float32)
                          + bka[...]).astype(jnp.bfloat16)
            va_sc[...] = (jnp.dot(kva, wva[...], preferred_element_type=jnp.float32)
                          + bva[...]).astype(jnp.bfloat16)
            kb_sc[...] = (jnp.dot(kvb, wkb[...], preferred_element_type=jnp.float32)
                          + bkb[...]).astype(jnp.bfloat16)
            vb_sc[...] = (jnp.dot(kvb, wvb[...], preferred_element_type=jnp.float32)
                          + bvb[...]).astype(jnp.bfloat16)

        cap = cap_ref[0].astype(jnp.float32)                         # (tq, D)
        keep = (mask_ref[0] > 0) if has_mask else None               # (1,Tk) or (tq,Tk)
        # NOTE: fully-masked rows fall back to a uniform distribution (max-subtraction
        # trick) rather than NaN; the demo masks never produce fully-masked rows.

        xna = _layer_norm(cap, ga_ref[...], bta_ref[...]).astype(jnp.bfloat16)
        fa = _attend(xna, wqa, bqa, ka_sc[...], va_sc[...], woa, boa, keep, num_heads)
        xnb = _layer_norm(cap, gb_ref[...], btb_ref[...]).astype(jnp.bfloat16)
        fb = _attend(xnb, wqb, bqb, kb_sc[...], vb_sc[...], wob, bob, keep, num_heads)

        # _fuse_gate over the stacked (con, sen) pair, against the residual captions.
        inv_sqrt_d = 1.0 / math.sqrt(cap.shape[-1])
        s0 = jnp.sum(fa * cap, axis=-1, keepdims=True) * inv_sqrt_d  # (tq, 1)
        s1 = jnp.sum(fb * cap, axis=-1, keepdims=True) * inv_sqrt_d
        m = jnp.maximum(s0, s1)
        e0 = jnp.exp(s0 - m)
        e1 = jnp.exp(s1 - m)
        z = e0 + e1
        w0 = e0 / z                                                  # exact gate softmax
        w1 = e1 / z
        out_ref[0] = (w0 * fa + w1 * fb).astype(out_ref.dtype)
        # Tiny side output ([tq,2]); lane-dense relayout not worth it at these sizes.
        scores_ref[0] = jnp.concatenate([w0, w1], axis=-1).astype(scores_ref.dtype)
    return kernel


def make_combine_ffn_kernel(num_fused):
    """captions + mean(fused feats) -> LN -> Linear -> ReLU -> Linear -> +residual.

    Operates on the flattened (B*T, D) token stream (grid over row tiles).
    """
    def kernel(*refs):
        cap_ref = refs[0]
        fused_refs = refs[1:1 + num_fused]
        gamma_ref, beta_ref, w1_ref, b1_ref, w2_ref, b2_ref, out_ref = refs[1 + num_fused:]

        cap = cap_ref[...].astype(jnp.float32)                       # (rows, D)
        acc = fused_refs[0][...].astype(jnp.float32)
        for fr in fused_refs[1:]:
            acc = acc + fr[...].astype(jnp.float32)
        x = cap + acc * (1.0 / num_fused)                            # fuse_feats

        xn = _layer_norm(x, gamma_ref[...], beta_ref[...]).astype(jnp.bfloat16)
        h = jnp.dot(xn, w1_ref[...], preferred_element_type=jnp.float32) + b1_ref[...]
        h = jnp.maximum(h, 0.0)
        y = jnp.dot(h.astype(jnp.bfloat16), w2_ref[...],
                    preferred_element_type=jnp.float32) + b2_ref[...]
        out_ref[...] = (x + y).astype(out_ref.dtype)
    return kernel


# ----------------------------------------------------------------------------
# pallas_call wrappers
# ----------------------------------------------------------------------------

def _rep2(shape):
    """Weight/bias replicated across a rank-2 grid (block index never changes)."""
    zeros = (0,) * len(shape)
    # TODO(synk): pipeline_mode=pl.Buffered(1) would halve the VMEM footprint of
    # these never-changing blocks; left out pending API verification on this jax.
    return pl.BlockSpec(shape, lambda b, q: zeros)


def _rep1(shape):
    zeros = (0,) * len(shape)
    return pl.BlockSpec(shape, lambda r: zeros)


def _pick_q_tile(T, q_tile=None):
    if q_tile is not None and T % q_tile == 0:
        return q_tile
    if T <= 256:
        return T
    for t in (256, 128):            # 256 fills v6e/v7x MXU; 128 fine on v5e
        if T % t == 0:
            return t
    return T


def _pick_row_tile(N, row_tile=None):
    if row_tile is not None and N % row_tile == 0:
        return row_tile
    if N <= 512:
        return N
    for t in (512, 256, 128):
        if N % t == 0:
            return t
    return N


def self_attention_call(x, gamma, beta, p, num_heads, q_tile=None):
    """Causal self-attention block (mask generated in-kernel). Returns bf16 [B,T,D]."""
    B, T, D = x.shape
    tq = _pick_q_tile(T, q_tile)
    nq = T // tq
    return pl.pallas_call(
        make_self_attention_kernel(num_heads, tq),
        out_shape=jax.ShapeDtypeStruct((B, T, D), jnp.bfloat16),
        grid=(B, nq),
        in_specs=[
            pl.BlockSpec((1, T, D), lambda b, q: (b, 0, 0)),     # x: full seq (q=k=v source)
            _rep2((1, D)), _rep2((1, D)),                        # LN gamma, beta
            _rep2((D, D)), _rep2((1, D)),                        # Wq, bq (full-width)
            _rep2((D, D)), _rep2((1, D)),                        # Wk, bk
            _rep2((D, D)), _rep2((1, D)),                        # Wv, bv
            _rep2((D, D)), _rep2((1, D)),                        # Wo, bo
        ],
        out_specs=pl.BlockSpec((1, tq, D), lambda b, q: (b, q, 0)),
        scratch_shapes=[pltpu.VMEM((T, D), jnp.bfloat16) for _ in range(3)],
        compiler_params=pltpu.CompilerParams(
            dimension_semantics=("parallel", "arbitrary"),       # q axis reuses K/V scratch
            vmem_limit_bytes=_VMEM_LIMIT),
    )(x, gamma, beta,
      p['wq'], p['bq'], p['wk'], p['bk'], p['wv'], p['bv'], p['wo'], p['bo'])


def cross_fuse_call(cap, kv_a, kv_b, mask, ln_a, ln_b, p_a, p_b, num_heads, q_tile=None):
    """Paired cross-attention (con, sen) + fuse gate, one fused kernel per feature pair."""
    B, T, D = cap.shape
    Tk = kv_a.shape[1]
    has_mask = mask is not None
    tq = _pick_q_tile(T, q_tile)
    nq = T // tq

    cap_spec = pl.BlockSpec((1, tq, D), lambda b, q: (b, q, 0))
    kv_spec = pl.BlockSpec((1, Tk, D), lambda b, q: (b, 0, 0))

    # K/V features feed only the MXU -> ship them as bf16 (halves their DMA).
    in_specs = [cap_spec, kv_spec, kv_spec]
    args = [cap, kv_a.astype(jnp.bfloat16), kv_b.astype(jnp.bfloat16)]
    if has_mask:
        mask = mask.astype(jnp.float32)
        if mask.shape[1] == 1:                                   # [B,1,Tk] broadcast in-kernel
            in_specs.append(pl.BlockSpec((1, 1, Tk), lambda b, q: (b, 0, 0)))
        else:                                                    # [B,Tq,Tk]
            in_specs.append(pl.BlockSpec((1, tq, Tk), lambda b, q: (b, q, 0)))
        args.append(mask)

    in_specs += [_rep2((1, D))] * 4                              # LN_a, LN_b params
    args += [ln_a[0], ln_a[1], ln_b[0], ln_b[1]]
    for p in (p_a, p_b):                                         # full-width MHA params
        in_specs += [_rep2((D, D)), _rep2((1, D))] * 4
        args += [p['wq'], p['bq'], p['wk'], p['bk'],
                 p['wv'], p['bv'], p['wo'], p['bo']]

    out, scores = pl.pallas_call(
        make_cross_fuse_kernel(num_heads, has_mask),
        out_shape=(jax.ShapeDtypeStruct((B, T, D), jnp.bfloat16),
                   jax.ShapeDtypeStruct((B, T, 2), jnp.float32)),
        grid=(B, nq),
        in_specs=in_specs,
        out_specs=(pl.BlockSpec((1, tq, D), lambda b, q: (b, q, 0)),
                   pl.BlockSpec((1, tq, 2), lambda b, q: (b, q, 0))),
        scratch_shapes=[pltpu.VMEM((Tk, D), jnp.bfloat16) for _ in range(4)],
        compiler_params=pltpu.CompilerParams(
            dimension_semantics=("parallel", "arbitrary"),       # K/V scratch reused over q
            vmem_limit_bytes=_VMEM_LIMIT),
    )(*args)
    return out, scores


def combine_ffn_call(cap, fused_list, gamma, beta, p, row_tile=None):
    """Flattened-token combine + FFN + residual; returns f32 [B,T,D]."""
    B, T, D = cap.shape
    d_ff = p['w1'].shape[1]
    n = len(fused_list)
    N = B * T
    tr = _pick_row_tile(N, row_tile)
    nr = N // tr

    cap2 = cap.reshape(N, D)
    fused2 = [f.reshape(N, D) for f in fused_list]

    tile_spec = pl.BlockSpec((tr, D), lambda r: (r, 0))
    # TODO(synk): at production dims on v7x (64 MiB VMEM) add a d_ff grid axis with a
    # VMEM f32 accumulator so w1/w2 stream in tiles; at these dims they are tiny.
    in_specs = ([tile_spec] * (1 + n)
                + [_rep1((1, D)), _rep1((1, D)),
                   _rep1((D, d_ff)), _rep1((1, d_ff)),
                   _rep1((d_ff, D)), _rep1((1, D))])
    out2 = pl.pallas_call(
        make_combine_ffn_kernel(n),
        out_shape=jax.ShapeDtypeStruct((N, D), jnp.float32),
        grid=(nr,),
        in_specs=in_specs,
        out_specs=tile_spec,
        compiler_params=pltpu.CompilerParams(
            dimension_semantics=("parallel",),
            vmem_limit_bytes=_VMEM_LIMIT),
    )(cap2, *fused2, gamma, beta, p['w1'], p['b1'], p['w2'], p['b2'])
    return out2.reshape(B, T, D)


# ----------------------------------------------------------------------------
# one-time parameter prep (hoisted OUT of the forward: bf16 weights, f32 biases)
# ----------------------------------------------------------------------------

def prep_mha_params(p):
    w = lambda a: a.astype(jnp.bfloat16)
    b = lambda a: a.astype(jnp.float32)
    return {'wq': w(p['wq']), 'bq': b(p['bq']), 'wk': w(p['wk']), 'bk': b(p['bk']),
            'wv': w(p['wv']), 'bv': b(p['bv']), 'wo': w(p['wo']), 'bo': b(p['bo'])}


def prep_ffn_params(p):
    return {'w1': p['w1'].astype(jnp.bfloat16), 'b1': p['b1'].astype(jnp.float32),
            'w2': p['w2'].astype(jnp.bfloat16), 'b2': p['b2'].astype(jnp.float32)}


def prepare_decoder_params(params):
    prepped = {
        'self_att': prep_mha_params(params['self_att']),
        'ffn': prep_ffn_params(params['ffn']),
        'ln': [(g.astype(jnp.float32), b.astype(jnp.float32)) for (g, b) in params['ln']],
    }
    for ft in ('two_d', 'three_d', 'audio', 'sem'):
        if ft in params:
            prepped[ft] = {'con': prep_mha_params(params[ft]['con']),
                           'sen': prep_mha_params(params[ft]['sen'])}
    return prepped


# ----------------------------------------------------------------------------
# DecoderLayer forward (glue in plain JAX; compute in fused Pallas kernels)
# ----------------------------------------------------------------------------

def decoder_layer_forward(prepped, captions, seq_masks, sem_feats, vis_feats, num_heads):
    # The decoder self-attention mask (subsequent-positions mask) is regenerated
    # in-kernel from iota compares, so the dense seq_masks tensor is never DMA'd.
    # TODO(synk): arbitrary (non-causal / padded) seq_masks would need a mask input.
    del seq_masks
    ln = prepped['ln']                     # 10 (gamma, beta) pairs, each (1, D)
    cpt_words, senti_words = sem_feats

    # 1) self-attention + residual (LN 0), one fused kernel; output stays bf16 in HBM
    captions = self_attention_call(captions, ln[0][0], ln[0][1],
                                   prepped['self_att'], num_heads)

    # 2) semantic cross-attentions (LN 1, 2) + fuse gate, one fused kernel, no mask
    sem_fused, sem_scores = cross_fuse_call(
        captions, cpt_words, senti_words, None,
        ln[1], ln[2], prepped['sem']['con'], prepped['sem']['sen'], num_heads)
    fuse_scores = {'sem_scores': sem_scores}
    fused_feats = [sem_fused]

    # 3) visual cross-attention pairs + fuse gates, one fused kernel per feature type
    ln_idx = 3
    for feat_type, (con_feats, sen_feats, feat_masks) in vis_feats.items():
        f_feats, f_scores = cross_fuse_call(
            captions, con_feats, sen_feats, feat_masks,
            ln[ln_idx], ln[ln_idx + 1],
            prepped[feat_type]['con'], prepped[feat_type]['sen'], num_heads)
        ln_idx += 2
        fuse_scores[f'{feat_type}_scores'] = f_scores
        fused_feats.append(f_feats)

    # 4) combine + feed-forward + residual (LN 9), flattened-token fused kernel
    #    fuse_feats = captions + (sem + sum(vis)) / (1 + len(vis))
    out = combine_ffn_call(captions, fused_feats, ln[9][0], ln[9][1], prepped['ffn'])
    return out, fuse_scores


# ----------------------------------------------------------------------------
# Deterministic parameter init (synthetic; mirrors module __init__ shapes)
# ----------------------------------------------------------------------------

def init_linear(key, d_in, d_out, scale=0.02):
    kw, kb = jax.random.split(key)
    w = jax.random.normal(kw, (d_in, d_out), jnp.float32) * scale
    b = jax.random.normal(kb, (1, d_out), jnp.float32) * scale
    return w, b


def init_mha_params(key, d_model):
    ks = jax.random.split(key, 4)
    wq, bq = init_linear(ks[0], d_model, d_model)
    wk, bk = init_linear(ks[1], d_model, d_model)
    wv, bv = init_linear(ks[2], d_model, d_model)
    wo, bo = init_linear(ks[3], d_model, d_model)
    return dict(wq=wq, bq=bq, wk=wk, bk=bk, wv=wv, bv=bv, wo=wo, bo=bo)


def init_decoder_params(key, d_model, d_ff):
    ks = jax.random.split(key, 16)
    params = {'self_att': init_mha_params(ks[0], d_model)}
    i = 1
    for feat_type in ['two_d', 'three_d', 'audio', 'sem']:
        params[feat_type] = {'con': init_mha_params(ks[i], d_model),
                             'sen': init_mha_params(ks[i + 1], d_model)}
        i += 2
    w1, b1 = init_linear(ks[i], d_model, d_ff)
    w2, b2 = init_linear(ks[i + 1], d_ff, d_model)
    params['ffn'] = dict(w1=w1, b1=b1, w2=w2, b2=b2)
    params['ln'] = [(jnp.ones((1, d_model), jnp.float32),
                     jnp.zeros((1, d_model), jnp.float32)) for _ in range(10)]
    return params


# ----------------------------------------------------------------------------
# Demo
# ----------------------------------------------------------------------------

if __name__ == "__main__":
    d_model, n_heads, d_ff = 32, 4, 64
    B, T = 2, 8
    N_CPT, N_SEN, N_2D, N_3D = 8, 8, 16, 8

    key = jax.random.PRNGKey(0)
    keys = jax.random.split(key, 12)

    params = init_decoder_params(keys[0], d_model, d_ff)
    prepped = prepare_decoder_params(params)      # weight prep done ONCE, outside forward

    captions = jax.random.normal(keys[1], (B, T, d_model), jnp.float32)
    # causal (subsequent) mask; regenerated in-kernel, kept here for interface parity
    seq_masks = jnp.broadcast_to(jnp.tril(jnp.ones((T, T), jnp.float32)), (B, T, T))

    cpt_words = jax.random.normal(keys[2], (B, N_CPT, d_model), jnp.float32)
    senti_words = jax.random.normal(keys[3], (B, N_SEN, d_model), jnp.float32)

    two_d_con = jax.random.normal(keys[4], (B, N_2D, d_model), jnp.float32)
    two_d_sen = jax.random.normal(keys[5], (B, N_2D, d_model), jnp.float32)
    two_d_mask = (jnp.arange(N_2D)[None, None, :]
                  < jnp.array([12, 16])[:, None, None]).astype(jnp.float32)   # [B,1,N_2D]

    three_d_con = jax.random.normal(keys[6], (B, N_3D, d_model), jnp.float32)
    three_d_sen = jax.random.normal(keys[7], (B, N_3D, d_model), jnp.float32)
    three_d_mask = (jnp.arange(N_3D)[None, None, :]
                    < jnp.array([8, 6])[:, None, None]).astype(jnp.float32)   # [B,1,N_3D]

    vis_feats = {
        'two_d': (two_d_con, two_d_sen, two_d_mask),
        'three_d': (three_d_con, three_d_sen, three_d_mask),
    }

    out, fuse_scores = decoder_layer_forward(
        prepped, captions, seq_masks, (cpt_words, senti_words), vis_feats, n_heads)

    jax.block_until_ready(out)
    for v in fuse_scores.values():
        jax.block_until_ready(v)

    assert out.shape == (B, T, d_model)
    assert out.dtype == jnp.float32
    assert fuse_scores['sem_scores'].shape == (B, T, 2)
    assert fuse_scores['two_d_scores'].shape == (B, T, 2)
    assert fuse_scores['three_d_scores'].shape == (B, T, 2)
    assert bool(jnp.all(jnp.isfinite(out)))
    assert bool(jnp.all(jnp.abs(fuse_scores['sem_scores'].sum(-1) - 1.0) < 1e-5))
    print("KERNEL_OK")
</pallas_src>

<mosaic_0001>
module attributes {stable_mosaic.version = 11 : i64} {
  func.func @kernel(%arg0: i32, %arg1: i32, %arg2: memref<1x8x32xf32, #tpu.memory_space<vmem>>, %arg3: memref<1x32xf32, #tpu.memory_space<vmem>>, %arg4: memref<1x32xf32, #tpu.memory_space<vmem>>, %arg5: memref<32x32xbf16, #tpu.memory_space<vmem>>, %arg6: memref<1x32xf32, #tpu.memory_space<vmem>>, %arg7: memref<32x32xbf16, #tpu.memory_space<vmem>>, %arg8: memref<1x32xf32, #tpu.memory_space<vmem>>, %arg9: memref<32x32xbf16, #tpu.memory_space<vmem>>, %arg10: memref<1x32xf32, #tpu.memory_space<vmem>>, %arg11: memref<32x32xbf16, #tpu.memory_space<vmem>>, %arg12: memref<1x32xf32, #tpu.memory_space<vmem>>, %arg13: memref<1x8x32xbf16, #tpu.memory_space<vmem>>, %arg14: memref<8x32xbf16, #tpu.memory_space<vmem>>, %arg15: memref<8x32xbf16, #tpu.memory_space<vmem>>, %arg16: memref<8x32xbf16, #tpu.memory_space<vmem>>) attributes {dimension_semantics = [#tpu.dimension_semantics<parallel>, #tpu.dimension_semantics<arbitrary>], iteration_bounds = array<i64: 2, 1>, scalar_prefetch = 0 : i64, scratch_operands = 3 : i64, tpu.core_type = #tpu.core_type<tc>, window_params = [{transform_indices = @transform_0, window_bounds = array<i64: 1, 8, 32>}, {pipeline_mode = #tpu.pipeline_mode<synchronous>, transform_indices = @transform_1, window_bounds = array<i64: 1, 32>}, {pipeline_mode = #tpu.pipeline_mode<synchronous>, transform_indices = @transform_2, window_bounds = array<i64: 1, 32>}, {pipeline_mode = #tpu.pipeline_mode<synchronous>, transform_indices = @transform_3, window_bounds = array<i64: 32, 32>}, {pipeline_mode = #tpu.pipeline_mode<synchronous>, transform_indices = @transform_4, window_bounds = array<i64: 1, 32>}, {pipeline_mode = #tpu.pipeline_mode<synchronous>, transform_indices = @transform_5, window_bounds = array<i64: 32, 32>}, {pipeline_mode = #tpu.pipeline_mode<synchronous>, transform_indices = @transform_6, window_bounds = array<i64: 1, 32>}, {pipeline_mode = #tpu.pipeline_mode<synchronous>, transform_indices = @transform_7, window_bounds = array<i64: 32, 32>}, {pipeline_mode = #tpu.pipeline_mode<synchronous>, transform_indices = @transform_8, window_bounds = array<i64: 1, 32>}, {pipeline_mode = #tpu.pipeline_mode<synchronous>, transform_indices = @transform_9, window_bounds = array<i64: 32, 32>}, {pipeline_mode = #tpu.pipeline_mode<synchronous>, transform_indices = @transform_10, window_bounds = array<i64: 1, 32>}, {transform_indices = @transform_11, window_bounds = array<i64: 1, 8, 32>}]} {
    %c0_i32 = arith.constant 0 : i32
    %0 = arith.cmpi eq, %arg1, %c0_i32 : i32
    %1 = arith.extui %0 : i1 to i32
    %c0_i32_0 = arith.constant 0 : i32
    %2 = arith.cmpi ne, %1, %c0_i32_0 : i32
    scf.if %2 {
      %c0_43 = arith.constant 0 : index
      %c0_44 = arith.constant 0 : index
      %c0_45 = arith.constant 0 : index
      %114 = vector.load %arg2[%c0_43, %c0_44, %c0_45] : memref<1x8x32xf32, #tpu.memory_space<vmem>>, vector<1x8x32xf32>
      %115 = vector.shape_cast %114 : vector<1x8x32xf32> to vector<8x32xf32>
      %c0_46 = arith.constant 0 : index
      %c0_47 = arith.constant 0 : index
      %116 = vector.load %arg3[%c0_46, %c0_47] : memref<1x32xf32, #tpu.memory_space<vmem>>, vector<1x32xf32>
      %c0_48 = arith.constant 0 : index
      %c0_49 = arith.constant 0 : index
      %117 = vector.load %arg4[%c0_48, %c0_49] : memref<1x32xf32, #tpu.memory_space<vmem>>, vector<1x32xf32>
      %cst_50 = arith.constant dense<0.000000e+00> : vector<8xf32>
      %118 = vector.multi_reduction <add>, %115, %cst_50 [1] : vector<8x32xf32> to vector<8xf32>
      %119 = vector.shape_cast %118 : vector<8xf32> to vector<8x1xf32>
      %cst_51 = arith.constant 3.200000e+01 : f32
      %120 = vector.broadcast %cst_51 : f32 to vector<8x1xf32>
      %121 = arith.divf %119, %120 : vector<8x1xf32>
      %122 = vector.broadcast %121 : vector<8x1xf32> to vector<8x32xf32>
      %123 = arith.subf %115, %122 : vector<8x32xf32>
      %124 = arith.mulf %123, %123 : vector<8x32xf32>
      %cst_52 = arith.constant dense<0.000000e+00> : vector<8xf32>
      %125 = vector.multi_reduction <add>, %124, %cst_52 [1] : vector<8x32xf32> to vector<8xf32>
      %126 = vector.shape_cast %125 : vector<8xf32> to vector<8x1xf32>
      %cst_53 = arith.constant 3.200000e+01 : f32
      %127 = vector.broadcast %cst_53 : f32 to vector<8x1xf32>
      %128 = arith.divf %126, %127 : vector<8x1xf32>
      %129 = vector.broadcast %121 : vector<8x1xf32> to vector<8x32xf32>
      %130 = arith.subf %115, %129 : vector<8x32xf32>
      %cst_54 = arith.constant 9.99999974E-6 : f32
      %131 = vector.broadcast %cst_54 : f32 to vector<8x1xf32>
      %132 = arith.addf %128, %131 : vector<8x1xf32>
      %133 = math.rsqrt %132 : vector<8x1xf32>
      %134 = vector.broadcast %133 : vector<8x1xf32> to vector<8x32xf32>
      %135 = arith.mulf %130, %134 : vector<8x32xf32>
      %136 = vector.broadcast %116 : vector<1x32xf32> to vector<8x32xf32>
      %137 = arith.mulf %135, %136 : vector<8x32xf32>
      %138 = vector.broadcast %117 : vector<1x32xf32> to vector<8x32xf32>
      %139 = arith.addf %137, %138 : vector<8x32xf32>
      %140 = arith.truncf %139 : vector<8x32xf32> to vector<8x32xbf16>
      %c0_55 = arith.constant 0 : index
      %c0_56 = arith.constant 0 : index
      %141 = vector.load %arg14[%c0_55, %c0_56] : memref<8x32xbf16, #tpu.memory_space<vmem>>, vector<8x32xbf16>
      tpu.vector_store %arg14[%c0_55, %c0_56], %140 {strides = array<i32>} : memref<8x32xbf16, #tpu.memory_space<vmem>>, vector<8x32xbf16>,
      %c0_57 = arith.constant 0 : index
      %c0_58 = arith.constant 0 : index
      %142 = vector.load %arg7[%c0_57, %c0_58] : memref<32x32xbf16, #tpu.memory_space<vmem>>, vector<32x32xbf16>
      %cst_59 = arith.constant dense<0.000000e+00> : vector<8x32xf32>
      %143 = tpu.matmul %140, %142, %cst_59 {dimension_numbers = #tpu.dot_dimension_numbers<[1], [0], [0], [1], [0, 0, 1, 1], [], []>} : vector<8x32xbf16>, vector<32x32xbf16>, vector<8x32xf32> -> vector<8x32xf32>
      %c0_60 = arith.constant 0 : index
      %c0_61 = arith.constant 0 : index
      %144 = vector.load %arg8[%c0_60, %c0_61] : memref<1x32xf32, #tpu.memory_space<vmem>>, vector<1x32xf32>
      %145 = vector.broadcast %144 : vector<1x32xf32> to vector<8x32xf32>
      %146 = arith.addf %143, %145 : vector<8x32xf32>
      %147 = arith.truncf %146 : vector<8x32xf32> to vector<8x32xbf16>
      %c0_62 = arith.constant 0 : index
      %c0_63 = arith.constant 0 : index
      %148 = vector.load %arg15[%c0_62, %c0_63] : memref<8x32xbf16, #tpu.memory_space<vmem>>, vector<8x32xbf16>
      tpu.vector_store %arg15[%c0_62, %c0_63], %147 {strides = array<i32>} : memref<8x32xbf16, #tpu.memory_space<vmem>>, vector<8x32xbf16>,
      %c0_64 = arith.constant 0 : index
      %c0_65 = arith.constant 0 : index
      %149 = vector.load %arg9[%c0_64, %c0_65] : memref<32x32xbf16, #tpu.memory_space<vmem>>, vector<32x32xbf16>
      %cst_66 = arith.constant dense<0.000000e+00> : vector<8x32xf32>
      %150 = tpu.matmul %140, %149, %cst_66 {dimension_numbers = #tpu.dot_dimension_numbers<[1], [0], [0], [1], [0, 0, 1, 1], [], []>} : vector<8x32xbf16>, vector<32x32xbf16>, vector<8x32xf32> -> vector<8x32xf32>
      %c0_67 = arith.constant 0 : index
      %c0_68 = arith.constant 0 : index
      %151 = vector.load %arg10[%c0_67, %c0_68] : memref<1x32xf32, #tpu.memory_space<vmem>>, vector<1x32xf32>
      %152 = vector.broadcast %151 : vector<1x32xf32> to vector<8x32xf32>
      %153 = arith.addf %150, %152 : vector<8x32xf32>
      %154 = arith.truncf %153 : vector<8x32xf32> to vector<8x32xbf16>
      %c0_69 = arith.constant 0 : index
      %c0_70 = arith.constant 0 : index
      %155 = vector.load %arg16[%c0_69, %c0_70] : memref<8x32xbf16, #tpu.memory_space<vmem>>, vector<8x32xbf16>
      tpu.vector_store %arg16[%c0_69, %c0_70], %154 {strides = array<i32>} : memref<8x32xbf16, #tpu.memory_space<vmem>>, vector<8x32xbf16>,
    } else {
    }
    %c8_i32 = arith.constant 8 : i32
    %3 = arith.muli %arg1, %c8_i32 : i32
    %4 = tpu.assume_multiple %3, 8 : i32
    %c0 = arith.constant 0 : index
    %5 = arith.index_cast %4 : i32 to index
    %c0_1 = arith.constant 0 : index
    %6 = vector.load %arg2[%c0, %5, %c0_1] : memref<1x8x32xf32, #tpu.memory_space<vmem>>, vector<1x8x32xf32>
    %7 = vector.shape_cast %6 : vector<1x8x32xf32> to vector<8x32xf32>
    %8 = arith.index_cast %4 : i32 to index
    %c0_2 = arith.constant 0 : index
    %9 = vector.load %arg14[%8, %c0_2] : memref<8x32xbf16, #tpu.memory_space<vmem>>, vector<8x32xbf16>
    %10 = tpu.iota {dimensions = array<i32: 0>} : vector<8x8xi32>
    %11 = vector.broadcast %4 : i32 to vector<8x8xi32>
    %12 = arith.addi %11, %10 : vector<8x8xi32>
    %13 = tpu.iota {dimensions = array<i32: 1>} : vector<8x8xi32>
    %14 = arith.cmpi sle, %13, %12 : vector<8x8xi32>
    %c0_3 = arith.constant 0 : index
    %c0_4 = arith.constant 0 : index
    %15 = vector.load %arg15[%c0_3, %c0_4] : memref<8x32xbf16, #tpu.memory_space<vmem>>, vector<8x32xbf16>
    %c0_5 = arith.constant 0 : index
    %c0_6 = arith.constant 0 : index
    %16 = vector.load %arg16[%c0_5, %c0_6] : memref<8x32xbf16, #tpu.memory_space<vmem>>, vector<8x32xbf16>
    %c0_7 = arith.constant 0 : index
    %c0_8 = arith.constant 0 : index
    %17 = vector.load %arg5[%c0_7, %c0_8] : memref<32x32xbf16, #tpu.memory_space<vmem>>, vector<32x32xbf16>
    %cst = arith.constant dense<0.000000e+00> : vector<8x32xf32>
    %18 = tpu.matmul %9, %17, %cst {dimension_numbers = #tpu.dot_dimension_numbers<[1], [0], [0], [1], [0, 0, 1, 1], [], []>} : vector<8x32xbf16>, vector<32x32xbf16>, vector<8x32xf32> -> vector<8x32xf32>
    %c0_9 = arith.constant 0 : index
    %c0_10 = arith.constant 0 : index
    %19 = vector.load %arg6[%c0_9, %c0_10] : memref<1x32xf32, #tpu.memory_space<vmem>>, vector<1x32xf32>
    %20 = vector.broadcast %19 : vector<1x32xf32> to vector<8x32xf32>
    %21 = arith.addf %18, %20 : vector<8x32xf32>
    %22 = vector.extract_strided_slice %21 {offsets = [0, 0], sizes = [8, 8], strides = [1, 1]} : vector<8x32xf32> to vector<8x8xf32>
    %23 = arith.truncf %22 : vector<8x8xf32> to vector<8x8xbf16>
    %24 = vector.extract_strided_slice %15 {offsets = [0, 0], sizes = [8, 8], strides = [1, 1]} : vector<8x32xbf16> to vector<8x8xbf16>
    %cst_11 = arith.constant dense<0.000000e+00> : vector<8x8xf32>
    %25 = tpu.matmul %23, %24, %cst_11 {dimension_numbers = #tpu.dot_dimension_numbers<[1], [1], [0], [0], [0, 0, 1, 0], [], []>} : vector<8x8xbf16>, vector<8x8xbf16>, vector<8x8xf32> -> vector<8x8xf32>
    %cst_12 = arith.constant 0.353553385 : f32
    %26 = vector.broadcast %cst_12 : f32 to vector<8x8xf32>
    %27 = arith.mulf %25, %26 : vector<8x8xf32>
    %cst_13 = arith.constant -1.000000e+09 : f32
    %28 = vector.broadcast %cst_13 : f32 to vector<8x8xf32>
    %29 = arith.select %14, %27, %28 : vector<8x8xi1>, vector<8x8xf32>
    %cst_14 = arith.constant dense<0xFF800000> : vector<8xf32>
    %30 = vector.multi_reduction <maximumf>, %29, %cst_14 [1] : vector<8x8xf32> to vector<8xf32>
    %31 = vector.shape_cast %30 : vector<8xf32> to vector<8x1xf32>
    %32 = vector.broadcast %31 : vector<8x1xf32> to vector<8x8xf32>
    %33 = arith.subf %29, %32 : vector<8x8xf32>
    %34 = math.exp %33 : vector<8x8xf32>
    %cst_15 = arith.constant dense<0.000000e+00> : vector<8xf32>
    %35 = vector.multi_reduction <add>, %34, %cst_15 [1] : vector<8x8xf32> to vector<8xf32>
    %36 = vector.shape_cast %35 : vector<8xf32> to vector<8x1xf32>
    %37 = vector.broadcast %36 : vector<8x1xf32> to vector<8x8xf32>
    %38 = arith.divf %34, %37 : vector<8x8xf32>
    %39 = arith.truncf %38 : vector<8x8xf32> to vector<8x8xbf16>
    %40 = vector.extract_strided_slice %16 {offsets = [0, 0], sizes = [8, 8], strides = [1, 1]} : vector<8x32xbf16> to vector<8x8xbf16>
    %cst_16 = arith.constant dense<0.000000e+00> : vector<8x8xf32>
    %41 = tpu.matmul %39, %40, %cst_16 {dimension_numbers = #tpu.dot_dimension_numbers<[1], [0], [0], [1], [0, 0, 1, 1], [], []>} : vector<8x8xbf16>, vector<8x8xbf16>, vector<8x8xf32> -> vector<8x8xf32>
    %42 = vector.extract_strided_slice %21 {offsets = [0, 8], sizes = [8, 8], strides = [1, 1]} : vector<8x32xf32> to vector<8x8xf32>
    %43 = arith.truncf %42 : vector<8x8xf32> to vector<8x8xbf16>
    %44 = vector.extract_strided_slice %15 {offsets = [0, 8], sizes = [8, 8], strides = [1, 1]} : vector<8x32xbf16> to vector<8x8xbf16>
    %cst_17 = arith.constant dense<0.000000e+00> : vector<8x8xf32>
    %45 = tpu.matmul %43, %44, %cst_17 {dimension_numbers = #tpu.dot_dimension_numbers<[1], [1], [0], [0], [0, 0, 1, 0], [], []>} : vector<8x8xbf16>, vector<8x8xbf16>, vector<8x8xf32> -> vector<8x8xf32>
    %cst_18 = arith.constant 0.353553385 : f32
    %46 = vector.broadcast %cst_18 : f32 to vector<8x8xf32>
    %47 = arith.mulf %45, %46 : vector<8x8xf32>
    %cst_19 = arith.constant -1.000000e+09 : f32
    %48 = vector.broadcast %cst_19 : f32 to vector<8x8xf32>
    %49 = arith.select %14, %47, %48 : vector<8x8xi1>, vector<8x8xf32>
    %cst_20 = arith.constant dense<0xFF800000> : vector<8xf32>
    %50 = vector.multi_reduction <maximumf>, %49, %cst_20 [1] : vector<8x8xf32> to vector<8xf32>
    %51 = vector.shape_cast %50 : vector<8xf32> to vector<8x1xf32>
    %52 = vector.broadcast %51 : vector<8x1xf32> to vector<8x8xf32>
    %53 = arith.subf %49, %52 : vector<8x8xf32>
    %54 = math.exp %53 : vector<8x8xf32>
    %cst_21 = arith.constant dense<0.000000e+00> : vector<8xf32>
    %55 = vector.multi_reduction <add>, %54, %cst_21 [1] : vector<8x8xf32> to vector<8xf32>
    %56 = vector.shape_cast %55 : vector<8xf32> to vector<8x1xf32>
    %57 = vector.broadcast %56 : vector<8x1xf32> to vector<8x8xf32>
    %58 = arith.divf %54, %57 : vector<8x8xf32>
    %59 = arith.truncf %58 : vector<8x8xf32> to vector<8x8xbf16>
    %60 = vector.extract_strided_slice %16 {offsets = [0, 8], sizes = [8, 8], strides = [1, 1]} : vector<8x32xbf16> to vector<8x8xbf16>
    %cst_22 = arith.constant dense<0.000000e+00> : vector<8x8xf32>
    %61 = tpu.matmul %59, %60, %cst_22 {dimension_numbers = #tpu.dot_dimension_numbers<[1], [0], [0], [1], [0, 0, 1, 1], [], []>} : vector<8x8xbf16>, vector<8x8xbf16>, vector<8x8xf32> -> vector<8x8xf32>
    %62 = vector.extract_strided_slice %21 {offsets = [0, 16], sizes = [8, 8], strides = [1, 1]} : vector<8x32xf32> to vector<8x8xf32>
    %63 = arith.truncf %62 : vector<8x8xf32> to vector<8x8xbf16>
    %64 = vector.extract_strided_slice %15 {offsets = [0, 16], sizes = [8, 8], strides = [1, 1]} : vector<8x32xbf16> to vector<8x8xbf16>
    %cst_23 = arith.constant dense<0.000000e+00> : vector<8x8xf32>
    %65 = tpu.matmul %63, %64, %cst_23 {dimension_numbers = #tpu.dot_dimension_numbers<[1], [1], [0], [0], [0, 0, 1, 0], [], []>} : vector<8x8xbf16>, vector<8x8xbf16>, vector<8x8xf32> -> vector<8x8xf32>
    %cst_24 = arith.constant 0.353553385 : f32
    %66 = vector.broadcast %cst_24 : f32 to vector<8x8xf32>
    %67 = arith.mulf %65, %66 : vector<8x8xf32>
    %cst_25 = arith.constant -1.000000e+09 : f32
    %68 = vector.broadcast %cst_25 : f32 to vector<8x8xf32>
    %69 = arith.select %14, %67, %68 : vector<8x8xi1>, vector<8x8xf32>
    %cst_26 = arith.constant dense<0xFF800000> : vector<8xf32>
    %70 = vector.multi_reduction <maximumf>, %69, %cst_26 [1] : vector<8x8xf32> to vector<8xf32>
    %71 = vector.shape_cast %70 : vector<8xf32> to vector<8x1xf32>
    %72 = vector.broadcast %71 : vector<8x1xf32> to vector<8x8xf32>
    %73 = arith.subf %69, %72 : vector<8x8xf32>
    %74 = math.exp %73 : vector<8x8xf32>
    %cst_27 = arith.constant dense<0.000000e+00> : vector<8xf32>
    %75 = vector.multi_reduction <add>, %74, %cst_27 [1] : vector<8x8xf32> to vector<8xf32>
    %76 = vector.shape_cast %75 : vector<8xf32> to vector<8x1xf32>
    %77 = vector.broadcast %76 : vector<8x1xf32> to vector<8x8xf32>
    %78 = arith.divf %74, %77 : vector<8x8xf32>
    %79 = arith.truncf %78 : vector<8x8xf32> to vector<8x8xbf16>
    %80 = vector.extract_strided_slice %16 {offsets = [0, 16], sizes = [8, 8], strides = [1, 1]} : vector<8x32xbf16> to vector<8x8xbf16>
    %cst_28 = arith.constant dense<0.000000e+00> : vector<8x8xf32>
    %81 = tpu.matmul %79, %80, %cst_28 {dimension_numbers = #tpu.dot_dimension_numbers<[1], [0], [0], [1], [0, 0, 1, 1], [], []>} : vector<8x8xbf16>, vector<8x8xbf16>, vector<8x8xf32> -> vector<8x8xf32>
    %82 = vector.extract_strided_slice %21 {offsets = [0, 24], sizes = [8, 8], strides = [1, 1]} : vector<8x32xf32> to vector<8x8xf32>
    %83 = arith.truncf %82 : vector<8x8xf32> to vector<8x8xbf16>
    %84 = vector.extract_strided_slice %15 {offsets = [0, 24], sizes = [8, 8], strides = [1, 1]} : vector<8x32xbf16> to vector<8x8xbf16>
    %cst_29 = arith.constant dense<0.000000e+00> : vector<8x8xf32>
    %85 = tpu.matmul %83, %84, %cst_29 {dimension_numbers = #tpu.dot_dimension_numbers<[1], [1], [0], [0], [0, 0, 1, 0], [], []>} : vector<8x8xbf16>, vector<8x8xbf16>, vector<8x8xf32> -> vector<8x8xf32>
    %cst_30 = arith.constant 0.353553385 : f32
    %86 = vector.broadcast %cst_30 : f32 to vector<8x8xf32>
    %87 = arith.mulf %85, %86 : vector<8x8xf32>
    %cst_31 = arith.constant -1.000000e+09 : f32
    %88 = vector.broadcast %cst_31 : f32 to vector<8x8xf32>
    %89 = arith.select %14, %87, %88 : vector<8x8xi1>, vector<8x8xf32>
    %cst_32 = arith.constant dense<0xFF800000> : vector<8xf32>
    %90 = vector.multi_reduction <maximumf>, %89, %cst_32 [1] : vector<8x8xf32> to vector<8xf32>
    %91 = vector.shape_cast %90 : vector<8xf32> to vector<8x1xf32>
    %92 = vector.broadcast %91 : vector<8x1xf32> to vector<8x8xf32>
    %93 = arith.subf %89, %92 : vector<8x8xf32>
    %94 = math.exp %93 : vector<8x8xf32>
    %cst_33 = arith.constant dense<0.000000e+00> : vector<8xf32>
    %95 = vector.multi_reduction <add>, %94, %cst_33 [1] : vector<8x8xf32> to vector<8xf32>
    %96 = vector.shape_cast %95 : vector<8xf32> to vector<8x1xf32>
    %97 = vector.broadcast %96 : vector<8x1xf32> to vector<8x8xf32>
    %98 = arith.divf %94, %97 : vector<8x8xf32>
    %99 = arith.truncf %98 : vector<8x8xf32> to vector<8x8xbf16>
    %100 = vector.extract_strided_slice %16 {offsets = [0, 24], sizes = [8, 8], strides = [1, 1]} : vector<8x32xbf16> to vector<8x8xbf16>
    %cst_34 = arith.constant dense<0.000000e+00> : vector<8x8xf32>
    %101 = tpu.matmul %99, %100, %cst_34 {dimension_numbers = #tpu.dot_dimension_numbers<[1], [0], [0], [1], [0, 0, 1, 1], [], []>} : vector<8x8xbf16>, vector<8x8xbf16>, vector<8x8xf32> -> vector<8x8xf32>
    %102 = tpu.concatenate %41, %61, %81, %101 in 1 : vector<8x8xf32>, vector<8x8xf32>, vector<8x8xf32>, vector<8x8xf32> -> vector<8x32xf32>
    %103 = arith.truncf %102 : vector<8x32xf32> to vector<8x32xbf16>
    %c0_35 = arith.constant 0 : index
    %c0_36 = arith.constant 0 : index
    %104 = vector.load %arg11[%c0_35, %c0_36] : memref<32x32xbf16, #tpu.memory_space<vmem>>, vector<32x32xbf16>
    %cst_37 = arith.constant dense<0.000000e+00> : vector<8x32xf32>
    %105 = tpu.matmul %103, %104, %cst_37 {dimension_numbers = #tpu.dot_dimension_numbers<[1], [0], [0], [1], [0, 0, 1, 1], [], []>} : vector<8x32xbf16>, vector<32x32xbf16>, vector<8x32xf32> -> vector<8x32xf32>
    %c0_38 = arith.constant 0 : index
    %c0_39 = arith.constant 0 : index
    %106 = vector.load %arg12[%c0_38, %c0_39] : memref<1x32xf32, #tpu.memory_space<vmem>>, vector<1x32xf32>
    %107 = vector.broadcast %106 : vector<1x32xf32> to vector<8x32xf32>
    %108 = arith.addf %105, %107 : vector<8x32xf32>
    %109 = arith.addf %7, %108 : vector<8x32xf32>
    %110 = arith.truncf %109 : vector<8x32xf32> to vector<8x32xbf16>
    %c0_40 = arith.constant 0 : index
    %c0_41 = arith.constant 0 : index
    %c0_42 = arith.constant 0 : index
    %111 = vector.load %arg13[%c0_40, %c0_41, %c0_42] : memref<1x8x32xbf16, #tpu.memory_space<vmem>>, vector<1x8x32xbf16>
    %112 = vector.shape_cast %111 : vector<1x8x32xbf16> to vector<8x32xbf16>
    %113 = vector.shape_cast %110 : vector<8x32xbf16> to vector<1x8x32xbf16>
    tpu.vector_store %arg13[%c0_40, %c0_41, %c0_42], %113 {strides = array<i32>} : memref<1x8x32xbf16, #tpu.memory_space<vmem>>, vector<1x8x32xbf16>,
    return
  }
  func.func @transform_0(%arg0: i32, %arg1: i32) -> (i32, i32, i32) {
    %c0_i32 = arith.constant 0 : i32
    %c0_i32_0 = arith.constant 0 : i32
    %c0_i32_1 = arith.constant 0 : i32
    return %arg0, %c0_i32, %c0_i32_0 : i32, i32, i32
  }
  func.func @transform_1(%arg0: i32, %arg1: i32) -> (i32, i32) {
    %c0_i32 = arith.constant 0 : i32
    %c0_i32_0 = arith.constant 0 : i32
    %c0_i32_1 = arith.constant 0 : i32
    return %c0_i32, %c0_i32_0 : i32, i32
  }
  func.func @transform_2(%arg0: i32, %arg1: i32) -> (i32, i32) {
    %c0_i32 = arith.constant 0 : i32
    %c0_i32_0 = arith.constant 0 : i32
    %c0_i32_1 = arith.constant 0 : i32
    return %c0_i32, %c0_i32_0 : i32, i32
  }
  func.func @transform_3(%arg0: i32, %arg1: i32) -> (i32, i32) {
    %c0_i32 = arith.constant 0 : i32
    %c0_i32_0 = arith.constant 0 : i32
    %c0_i32_1 = arith.constant 0 : i32
    return %c0_i32, %c0_i32_0 : i32, i32
  }
  func.func @transform_4(%arg0: i32, %arg1: i32) -> (i32, i32) {
    %c0_i32 = arith.constant 0 : i32
    %c0_i32_0 = arith.constant 0 : i32
    %c0_i32_1 = arith.constant 0 : i32
    return %c0_i32, %c0_i32_0 : i32, i32
  }
  func.func @transform_5(%arg0: i32, %arg1: i32) -> (i32, i32) {
    %c0_i32 = arith.constant 0 : i32
    %c0_i32_0 = arith.constant 0 : i32
    %c0_i32_1 = arith.constant 0 : i32
    return %c0_i32, %c0_i32_0 : i32, i32
  }
  func.func @transform_6(%arg0: i32, %arg1: i32) -> (i32, i32) {
    %c0_i32 = arith.constant 0 : i32
    %c0_i32_0 = arith.constant 0 : i32
    %c0_i32_1 = arith.constant 0 : i32
    return %c0_i32, %c0_i32_0 : i32, i32
  }
  func.func @transform_7(%arg0: i32, %arg1: i32) -> (i32, i32) {
    %c0_i32 = arith.constant 0 : i32
    %c0_i32_0 = arith.constant 0 : i32
    %c0_i32_1 = arith.constant 0 : i32
    return %c0_i32, %c0_i32_0 : i32, i32
  }
  func.func @transform_8(%arg0: i32, %arg1: i32) -> (i32, i32) {
    %c0_i32 = arith.constant 0 : i32
    %c0_i32_0 = arith.constant 0 : i32
    %c0_i32_1 = arith.constant 0 : i32
    return %c0_i32, %c0_i32_0 : i32, i32
  }
  func.func @transform_9(%arg0: i32, %arg1: i32) -> (i32, i32) {
    %c0_i32 = arith.constant 0 : i32
    %c0_i32_0 = arith.constant 0 : i32
    %c0_i32_1 = arith.constant 0 : i32
    return %c0_i32, %c0_i32_0 : i32, i32
  }
  func.func @transform_10(%arg0: i32, %arg1: i32) -> (i32, i32) {
    %c0_i32 = arith.constant 0 : i32
    %c0_i32_0 = arith.constant 0 : i32
    %c0_i32_1 = arith.constant 0 : i32
    return %c0_i32, %c0_i32_0 : i32, i32
  }
  func.func @transform_11(%arg0: i32, %arg1: i32) -> (i32, i32, i32) {
    %c0_i32 = arith.constant 0 : i32
    %c0_i32_0 = arith.constant 0 : i32
    return %arg0, %arg1, %c0_i32 : i32, i32, i32
  }
}

</mosaic_0001>

<llo_original>
// kernel: tpu_custom_call.1
$region0: #{tpu_custom_call.1}
  #allocation0 [shape = 'u32[]', space=smem, size = 0x4, offset = 0x4, fixed_abs, tag = 'smem constant byte address 0x4 - core index']
  #allocation1 [shape = 'u32[144,128]{1,0:T(1,128)}', space=vmem, size = 0x12000, scoped, tag = 'internal scratch']
  #allocation2 [shape = 'bf16[8,32]{1,0:T(8,128)(2,1)}', space=vmem, size = 0x800, scoped, tag = 'scratch operand']
  #allocation3 [shape = 'bf16[8,32]{1,0:T(8,128)(2,1)}', space=vmem, size = 0x800, scoped, tag = 'scratch operand']
  #allocation4 [shape = 'bf16[8,32]{1,0:T(8,128)(2,1)}', space=vmem, size = 0x800, scoped, tag = 'scratch operand']
  %s0 = inlined_call_operand.hbm [shape: f32[2,8,32], index: 0, kind: input, shape index: {}]
  %s1 = inlined_call_operand.hbm [shape: f32[1,32], index: 1, kind: input, shape index: {}]
  %s2 = inlined_call_operand.hbm [shape: f32[1,32], index: 2, kind: input, shape index: {}]
  %s3 = inlined_call_operand.hbm [shape: bf16[32,32], index: 3, kind: input, shape index: {}]
  %s4 = inlined_call_operand.hbm [shape: f32[1,32], index: 4, kind: input, shape index: {}]
  %s5 = inlined_call_operand.hbm [shape: bf16[32,32], index: 5, kind: input, shape index: {}]
  %s6 = inlined_call_operand.hbm [shape: f32[1,32], index: 6, kind: input, shape index: {}]
  %s7 = inlined_call_operand.hbm [shape: bf16[32,32], index: 7, kind: input, shape index: {}]
  %s8 = inlined_call_operand.hbm [shape: f32[1,32], index: 8, kind: input, shape index: {}]
  %s9 = inlined_call_operand.hbm [shape: bf16[32,32], index: 9, kind: input, shape index: {}]
  %s10 = inlined_call_operand.hbm [shape: f32[1,32], index: 10, kind: input, shape index: {}]
  %s11 = inlined_call_operand.hbm [shape: bf16[2,8,32], index: 11, kind: output, shape index: {}]
  %s12 = sld [smem:[#allocation0]]
  $region125: #{tpu_custom_call.1} parent=0
    _
  %s14 = ssub.s32 1, %s12
  %s15 = scalar_select 0, %s14, %s12
  $region1: #{tpu_custom_call.1} parent=0
    #allocation5 [shape = 'u8[8192]{0}', space=vmem, size = 0x2000, scoped, tag = 'input window, operand 0']
    #allocation6 [shape = 's32[2]{0}', space=sflag, size = 0x8, scoped, tag = 'scoped memory for tpu_custom_call.1']
    #allocation7 [shape = 's32[2]{0}', space=sflag, size = 0x8, scoped, tag = 'scoped memory for tpu_custom_call.1']
    #allocation8 [shape = 'u8[512]{0}', space=vmem, size = 0x400, scoped, tag = 'input window, operand 1, single buffered']
    #allocation9 [shape = 's32[1]{0}', space=sflag, size = 0x4, scoped, tag = 'scoped memory for tpu_custom_call.1']
    #allocation10 [shape = 'u8[512]{0}', space=vmem, size = 0x400, scoped, tag = 'input window, operand 2, single buffered']
    #allocation11 [shape = 'u8[8192]{0}', space=vmem, size = 0x2000, scoped, tag = 'input window, operand 3, single buffered']
    #allocation12 [shape = 's32[1]{0}', space=sflag, size = 0x4, scoped, tag = 'scoped memory for tpu_custom_call.1']
    #allocation13 [shape = 'u8[512]{0}', space=vmem, size = 0x400, scoped, tag = 'input window, operand 4, single buffered']
    #allocation14 [shape = 'u8[8192]{0}', space=vmem, size = 0x2000, scoped, tag = 'input window, operand 5, single buffered']
    #allocation15 [shape = 's32[1]{0}', space=sflag, size = 0x4, scoped, tag = 'scoped memory for tpu_custom_call.1']
    #allocation16 [shape = 'u8[512]{0}', space=vmem, size = 0x400, scoped, tag = 'input window, operand 6, single buffered']
    #allocation17 [shape = 'u8[8192]{0}', space=vmem, size = 0x2000, scoped, tag = 'input window, operand 7, single buffered']
    #allocation18 [shape = 's32[1]{0}', space=sflag, size = 0x4, scoped, tag = 'scoped memory for tpu_custom_call.1']
    #allocation19 [shape = 'u8[512]{0}', space=vmem, size = 0x400, scoped, tag = 'input window, operand 8, single buffered']
    #allocation20 [shape = 'u8[8192]{0}', space=vmem, size = 0x2000, scoped, tag = 'input window, operand 9, single buffered']
    #allocation21 [shape = 's32[1]{0}', space=sflag, size = 0x4, scoped, tag = 'scoped memory for tpu_custom_call.1']
    #allocation22 [shape = 'u8[512]{0}', space=vmem, size = 0x400, scoped, tag = 'input window, operand 10, single buffered']
    #allocation23 [shape = 'u8[4096]{0}', space=vmem, size = 0x1000, scoped, tag = 'output window, operand 0']
    %16 = vsyncpa [#allocation6], 0
    %s17 = scalar_lea.sflag [#allocation6], 1
    %18 = vsyncpa %s17, 0
    %19 = vsyncpa [#allocation9], 0
    %20 = vsyncpa [#allocation12], 0
    %21 = vsyncpa [#allocation15], 0
    %22 = vsyncpa [#allocation18], 0
    %23 = vsyncpa [#allocation21], 0
    %24 = vsyncpa [#allocation7], 0
    %s25 = scalar_lea.sflag [#allocation7], 1
    %26 = vsyncpa %s25, 0
    loop: start=0, step=1, limit=4
    $region2: #{tpu_custom_call.1} parent=1 // loop_pre_header
      _
    $region3: #{tpu_custom_call.1} parent=1 // loop_header
      %s28 = sphi 0, %s32
      %p29 = scmp.ge.s32.totalorder %s28, 4
      %s35 = sphi 0, %s47
      %s36 = sphi 0, %s43
      %s37 = sphi 0, %s35
      %s38 = sphi 0, %s36
      %s39 = sphi 0, %s37
      %s40 = sphi 0, %s38
      %s50 = sphi 0, %s52
      %s53 = sphi 0, %s50
      %s54 = sphi 0, %s53
      %s70 = sphi 0, %s54
      %s74 = sphi 0, %s74
      %s76 = sphi 0, %s74
      %s77 = sphi 0, %s76
      %s91 = sphi 0, %s77
      %s95 = sphi 0, %s95
      %s97 = sphi 0, %s95
      %s98 = sphi 0, %s97
      %s112 = sphi 0, %s98
      %s116 = sphi 0, %s116
      %s118 = sphi 0, %s116
      %s119 = sphi 0, %s118
      %s133 = sphi 0, %s119
      %s137 = sphi 0, %s137
      %s139 = sphi 0, %s137
      %s140 = sphi 0, %s139
      %s154 = sphi 0, %s140
      %s158 = sphi 0, %s158
      %s160 = sphi 0, %s158
      %s161 = sphi 0, %s160
      %s175 = sphi 0, %s161
      %s179 = sphi 0, %s179
      %s181 = sphi 0, %s179
      %s182 = sphi 0, %s181
      %s196 = sphi 0, %s182
      %s200 = sphi 0, %s200
      %s202 = sphi 0, %s200
      %s203 = sphi 0, %s202
      %s217 = sphi 0, %s203
      %s221 = sphi 0, %s221
      %s223 = sphi 0, %s221
      %s224 = sphi 0, %s223
      %s238 = sphi 0, %s224
      %s242 = sphi 0, %s242
      %s244 = sphi 0, %s242
      %s245 = sphi 0, %s244
      %s259 = sphi 0, %s245
      %s263 = sphi 0, %s263
      %s265 = sphi 0, %s263
      %s266 = sphi 0, %s265
      %s280 = sphi 0, %s266
      %s288 = sphi 0, %s290
      %s291 = sphi 0, %s288
      %s292 = sphi 0, %s291
      %s308 = sphi 0, %s292
    $region4: #{tpu_custom_call.1} parent=1 // loop_header_branch
      %31 = sbr.rel (%p29) target = $region8
    $region5: #{tpu_custom_call.1} parent=1 // loop_body
      %s33 = ssub.s32 %s28, 1
      %s34 = ssub.s32 %s28, 2
      %s41 = sadd.s32 1, %s36
      %p42 = scmp.ge.s32.totalorder %s41, 1
      %s43 = scalar_select %p42, 0, %s41
      %s44 = sadd.s32 1, %s35
      %s45 = scalar_select %p42, %s44, %s35
      %p46 = scmp.ge.s32.totalorder %s45, 2
      %s47 = scalar_select %p46, 0, %s45
      %s48 = ssub.s32 %s35, %s47
      %p49 = scmp.eq.s32.totalorder %s48, 0
      %s51 = sadd.s32 %s50, 1
      %s52 = scalar_select %p49, %s50, %s51
      %p55 = pneg %p49
      %p56 = scmp.eq.s32.totalorder %s28, 1
      %p57 = por %p55, %p56
      %p58 = scmp.ne.s32.totalorder %s50, %s53
      %p59 = scmp.eq.s32.totalorder %s28, 0
      %p60 = por %p58, %p59
      %p61 = scmp.ne.s32.totalorder %s50, %s53
      %p62 = scmp.eq.s32.totalorder %s33, 1
      %p63 = por %p61, %p62
      %p64 = scmp.ne.s32.totalorder %s53, %s54
      %p65 = scmp.eq.s32.totalorder %s33, 0
      %p66 = por %p64, %p65
      %p67 = scmp.ne.s32.totalorder %s53, %s54
      %p68 = scmp.eq.s32.totalorder %s34, 1
      %p69 = por %p67, %p68
      %p71 = scmp.ne.s32.totalorder %s54, %s70
      %p72 = scmp.eq.s32.totalorder %s34, 0
      %p73 = por %p71, %p72
      %s75 = sadd.s32 %s74, 1
      %p78 = scmp.eq.s32.totalorder %s28, 1
      %p79 = scmp.ne.s32.totalorder %s74, %s76
      %p80 = scmp.eq.s32.totalorder %s28, 0
      %p81 = por %p79, %p80
      %p82 = scmp.ne.s32.totalorder %s74, %s76
      %p83 = scmp.eq.s32.totalorder %s33, 1
      %p84 = por %p82, %p83
      %p85 = scmp.ne.s32.totalorder %s76, %s77
      %p86 = scmp.eq.s32.totalorder %s33, 0
      %p87 = por %p85, %p86
      %p88 = scmp.ne.s32.totalorder %s76, %s77
      %p89 = scmp.eq.s32.totalorder %s34, 1
      %p90 = por %p88, %p89
      %p92 = scmp.ne.s32.totalorder %s77, %s91
      %p93 = scmp.eq.s32.totalorder %s34, 0
      %p94 = por %p92, %p93
      %s96 = sadd.s32 %s95, 1
      %p99 = scmp.eq.s32.totalorder %s28, 1
      %p100 = scmp.ne.s32.totalorder %s95, %s97
      %p101 = scmp.eq.s32.totalorder %s28, 0
      %p102 = por %p100, %p101
      %p103 = scmp.ne.s32.totalorder %s95, %s97
      %p104 = scmp.eq.s32.totalorder %s33, 1
      %p105 = por %p103, %p104
      %p106 = scmp.ne.s32.totalorder %s97, %s98
      %p107 = scmp.eq.s32.totalorder %s33, 0
      %p108 = por %p106, %p107
      %p109 = scmp.ne.s32.totalorder %s97, %s98
      %p110 = scmp.eq.s32.totalorder %s34, 1
      %p111 = por %p109, %p110
      %p113 = scmp.ne.s32.totalorder %s98, %s112
      %p114 = scmp.eq.s32.totalorder %s34, 0
      %p115 = por %p113, %p114
      %s117 = sadd.s32 %s116, 1
      %p120 = scmp.eq.s32.totalorder %s28, 1
      %p121 = scmp.ne.s32.totalorder %s116, %s118
      %p122 = scmp.eq.s32.totalorder %s28, 0
      %p123 = por %p121, %p122
      %p124 = scmp.ne.s32.totalorder %s116, %s118
      %p125 = scmp.eq.s32.totalorder %s33, 1
      %p126 = por %p124, %p125
      %p127 = scmp.ne.s32.totalorder %s118, %s119
      %p128 = scmp.eq.s32.totalorder %s33, 0
      %p129 = por %p127, %p128
      %p130 = scmp.ne.s32.totalorder %s118, %s119
      %p131 = scmp.eq.s32.totalorder %s34, 1
      %p132 = por %p130, %p131
      %p134 = scmp.ne.s32.totalorder %s119, %s133
      %p135 = scmp.eq.s32.totalorder %s34, 0
      %p136 = por %p134, %p135
      %s138 = sadd.s32 %s137, 1
      %p141 = scmp.eq.s32.totalorder %s28, 1
      %p142 = scmp.ne.s32.totalorder %s137, %s139
      %p143 = scmp.eq.s32.totalorder %s28, 0
      %p144 = por %p142, %p143
      %p145 = scmp.ne.s32.totalorder %s137, %s139
      %p146 = scmp.eq.s32.totalorder %s33, 1
      %p147 = por %p145, %p146
      %p148 = scmp.ne.s32.totalorder %s139, %s140
      %p149 = scmp.eq.s32.totalorder %s33, 0
      %p150 = por %p148, %p149
      %p151 = scmp.ne.s32.totalorder %s139, %s140
      %p152 = scmp.eq.s32.totalorder %s34, 1
      %p153 = por %p151, %p152
      %p155 = scmp.ne.s32.totalorder %s140, %s154
      %p156 = scmp.eq.s32.totalorder %s34, 0
      %p157 = por %p155, %p156
      %s159 = sadd.s32 %s158, 1
      %p162 = scmp.eq.s32.totalorder %s28, 1
      %p163 = scmp.ne.s32.totalorder %s158, %s160
      %p164 = scmp.eq.s32.totalorder %s28, 0
      %p165 = por %p163, %p164
      %p166 = scmp.ne.s32.totalorder %s158, %s160
      %p167 = scmp.eq.s32.totalorder %s33, 1
      %p168 = por %p166, %p167
      %p169 = scmp.ne.s32.totalorder %s160, %s161
      %p170 = scmp.eq.s32.totalorder %s33, 0
      %p171 = por %p169, %p170
      %p172 = scmp.ne.s32.totalorder %s160, %s161
      %p173 = scmp.eq.s32.totalorder %s34, 1
      %p174 = por %p172, %p173
      %p176 = scmp.ne.s32.totalorder %s161, %s175
      %p177 = scmp.eq.s32.totalorder %s34, 0
      %p178 = por %p176, %p177
      %s180 = sadd.s32 %s179, 1
      %p183 = scmp.eq.s32.totalorder %s28, 1
      %p184 = scmp.ne.s32.totalorder %s179, %s181
      %p185 = scmp.eq.s32.totalorder %s28, 0
      %p186 = por %p184, %p185
      %p187 = scmp.ne.s32.totalorder %s179, %s181
      %p188 = scmp.eq.s32.totalorder %s33, 1
      %p189 = por %p187, %p188
      %p190 = scmp.ne.s32.totalorder %s181, %s182
      %p191 = scmp.eq.s32.totalorder %s33, 0
      %p192 = por %p190, %p191
      %p193 = scmp.ne.s32.totalorder %s181, %s182
      %p194 = scmp.eq.s32.totalorder %s34, 1
      %p195 = por %p193, %p194
      %p197 = scmp.ne.s32.totalorder %s182, %s196
      %p198 = scmp.eq.s32.totalorder %s34, 0
      %p199 = por %p197, %p198
      %s201 = sadd.s32 %s200, 1
      %p204 = scmp.eq.s32.totalorder %s28, 1
      %p205 = scmp.ne.s32.totalorder %s200, %s202
      %p206 = scmp.eq.s32.totalorder %s28, 0
      %p207 = por %p205, %p206
      %p208 = scmp.ne.s32.totalorder %s200, %s202
      %p209 = scmp.eq.s32.totalorder %s33, 1
      %p210 = por %p208, %p209
      %p211 = scmp.ne.s32.totalorder %s202, %s203
      %p212 = scmp.eq.s32.totalorder %s33, 0
      %p213 = por %p211, %p212
      %p214 = scmp.ne.s32.totalorder %s202, %s203
      %p215 = scmp.eq.s32.totalorder %s34, 1
      %p216 = por %p214, %p215
      %p218 = scmp.ne.s32.totalorder %s203, %s217
      %p219 = scmp.eq.s32.totalorder %s34, 0
      %p220 = por %p218, %p219
      %s222 = sadd.s32 %s221, 1
      %p225 = scmp.eq.s32.totalorder %s28, 1
      %p226 = scmp.ne.s32.totalorder %s221, %s223
      %p227 = scmp.eq.s32.totalorder %s28, 0
      %p228 = por %p226, %p227
      %p229 = scmp.ne.s32.totalorder %s221, %s223
      %p230 = scmp.eq.s32.totalorder %s33, 1
      %p231 = por %p229, %p230
      %p232 = scmp.ne.s32.totalorder %s223, %s224
      %p233 = scmp.eq.s32.totalorder %s33, 0
      %p234 = por %p232, %p233
      %p235 = scmp.ne.s32.totalorder %s223, %s224
      %p236 = scmp.eq.s32.totalorder %s34, 1
      %p237 = por %p235, %p236
      %p239 = scmp.ne.s32.totalorder %s224, %s238
      %p240 = scmp.eq.s32.totalorder %s34, 0
      %p241 = por %p239, %p240
      %s243 = sadd.s32 %s242, 1
      %p246 = scmp.eq.s32.totalorder %s28, 1
      %p247 = scmp.ne.s32.totalorder %s242, %s244
      %p248 = scmp.eq.s32.totalorder %s28, 0
      %p249 = por %p247, %p248
      %p250 = scmp.ne.s32.totalorder %s242, %s244
      %p251 = scmp.eq.s32.totalorder %s33, 1
      %p252 = por %p250, %p251
      %p253 = scmp.ne.s32.totalorder %s244, %s245
      %p254 = scmp.eq.s32.totalorder %s33, 0
      %p255 = por %p253, %p254
      %p256 = scmp.ne.s32.totalorder %s244, %s245
      %p257 = scmp.eq.s32.totalorder %s34, 1
      %p258 = por %p256, %p257
      %p260 = scmp.ne.s32.totalorder %s245, %s259
      %p261 = scmp.eq.s32.totalorder %s34, 0
      %p262 = por %p260, %p261
      %s264 = sadd.s32 %s263, 1
      %p267 = scmp.eq.s32.totalorder %s28, 1
      %p268 = scmp.ne.s32.totalorder %s263, %s265
      %p269 = scmp.eq.s32.totalorder %s28, 0
      %p270 = por %p268, %p269
      %p271 = scmp.ne.s32.totalorder %s263, %s265
      %p272 = scmp.eq.s32.totalorder %s33, 1
      %p273 = por %p271, %p272
      %p274 = scmp.ne.s32.totalorder %s265, %s266
      %p275 = scmp.eq.s32.totalorder %s33, 0
      %p276 = por %p274, %p275
      %p277 = scmp.ne.s32.totalorder %s265, %s266
      %p278 = scmp.eq.s32.totalorder %s34, 1
      %p279 = por %p277, %p278
      %p281 = scmp.ne.s32.totalorder %s266, %s280
      %p282 = scmp.eq.s32.totalorder %s34, 0
      %p283 = por %p281, %p282
      %s284 = ssub.s32 %s35, %s47
      %s285 = ssub.s32 %s36, %s43
      %s286 = sor.u32 %s284, %s285
      %p287 = scmp.eq.s32.totalorder %s286, 0
      %s289 = sadd.s32 %s288, 1
      %s290 = scalar_select %p287, %s288, %s289
      %p293 = pneg %p287
      %p294 = scmp.eq.s32.totalorder %s28, 1
      %p295 = por %p293, %p294
      %p296 = scmp.ne.s32.totalorder %s288, %s291
      %p297 = scmp.eq.s32.totalorder %s28, 0
      %p298 = por %p296, %p297
      %p299 = scmp.ne.s32.totalorder %s288, %s291
      %p300 = scmp.eq.s32.totalorder %s33, 1
      %p301 = por %p299, %p300
      %p302 = scmp.ne.s32.totalorder %s291, %s292
      %p303 = scmp.eq.s32.totalorder %s33, 0
      %p304 = por %p302, %p303
      %p305 = scmp.ne.s32.totalorder %s291, %s292
      %p306 = scmp.eq.s32.totalorder %s34, 1
      %p307 = por %p305, %p306
      %p309 = scmp.ne.s32.totalorder %s292, %s308
      %p310 = scmp.eq.s32.totalorder %s34, 0
      %p311 = por %p309, %p310
      %p312 = scmp.le.s32.totalorder 1, %s28
      %p313 = scmp.lt.s32.totalorder %s28, 3
      %p314 = pnand %p312, %p313
      %p315 = pneg %p314
      // Predicated region
      $region9: #{tpu_custom_call.1} parent=5 // pred_check
        _
      $region10: #{tpu_custom_call.1} parent=5 // pred_check_branch
        %317 = sbr.rel (%p314) target = $region12
      $region11: #{tpu_custom_call.1} parent=5 // pred_region
        %s318 = ssub.s32 %s28, 1
        // Predicated region
        $region13: #{tpu_custom_call.1} parent=11 // pred_check
          %p319 = pneg %p87
        $region14: #{tpu_custom_call.1} parent=11 // pred_check_branch
          %321 = sbr.rel (%p319) target = $region16
        $region15: #{tpu_custom_call.1} parent=11 // pred_region
          %s323 = ssub.s32 16, 16
          %324 = vsyncadd [#allocation9], %s323
          %s326 = sshll.u32 [#allocation8], 4
          %s327 = int_to_ptr.vmem [resolvable:$true] %s326
          %329 = dma.hbm_to_vmem [thread:$0]  %s1, 16, %s327, [#allocation9]
        $region16: #{tpu_custom_call.1} parent=11 // pred_fallthru
          _
        // Predicated region
        $region17: #{tpu_custom_call.1} parent=11 // pred_check
          %p330 = pneg %p108
        $region18: #{tpu_custom_call.1} parent=11 // pred_check_branch
          %332 = sbr.rel (%p330) target = $region20
        $region19: #{tpu_custom_call.1} parent=11 // pred_region
          %s334 = ssub.s32 16, 16
          %335 = vsyncadd [#allocation9], %s334
          %s337 = sshll.u32 [#allocation10], 4
          %s338 = int_to_ptr.vmem [resolvable:$true] %s337
          %340 = dma.hbm_to_vmem [thread:$0]  %s2, 16, %s338, [#allocation9]
        $region20: #{tpu_custom_call.1} parent=11 // pred_fallthru
          _
        // Predicated region
        $region21: #{tpu_custom_call.1} parent=11 // pred_check
          %p341 = pneg %p129
        $region22: #{tpu_custom_call.1} parent=11 // pred_check_branch
          %343 = sbr.rel (%p341) target = $region24
        $region23: #{tpu_custom_call.1} parent=11 // pred_region
          %s345 = ssub.s32 256, 256
          %346 = vsyncadd [#allocation12], %s345
          %s347 = sshll.u32 [#allocation11], 4
          %s348 = int_to_ptr.vmem [resolvable:$true] %s347
          %353 = dma.hbm_to_vmem [thread:$0]  %s3, 256, %s348, [#allocation12], 64, 64, 4
        $region24: #{tpu_custom_call.1} parent=11 // pred_fallthru
          _
        // Predicated region
        $region25: #{tpu_custom_call.1} parent=11 // pred_check
          %p354 = pneg %p150
        $region26: #{tpu_custom_call.1} parent=11 // pred_check_branch
          %356 = sbr.rel (%p354) target = $region28
        $region27: #{tpu_custom_call.1} parent=11 // pred_region
          %s358 = ssub.s32 16, 16
          %359 = vsyncadd [#allocation12], %s358
          %s361 = sshll.u32 [#allocation13], 4
          %s362 = int_to_ptr.vmem [resolvable:$true] %s361
          %364 = dma.hbm_to_vmem [thread:$0]  %s4, 16, %s362, [#allocation12]
        $region28: #{tpu_custom_call.1} parent=11 // pred_fallthru
          _
        // Predicated region
        $region29: #{tpu_custom_call.1} parent=11 // pred_check
          %p365 = pneg %p171
        $region30: #{tpu_custom_call.1} parent=11 // pred_check_branch
          %367 = sbr.rel (%p365) target = $region32
        $region31: #{tpu_custom_call.1} parent=11 // pred_region
          %s369 = ssub.s32 256, 256
          %370 = vsyncadd [#allocation15], %s369
          %s371 = sshll.u32 [#allocation14], 4
          %s372 = int_to_ptr.vmem [resolvable:$true] %s371
          %377 = dma.hbm_to_vmem [thread:$0]  %s5, 256, %s372, [#allocation15], 64, 64, 4
        $region32: #{tpu_custom_call.1} parent=11 // pred_fallthru
          _
        // Predicated region
        $region33: #{tpu_custom_call.1} parent=11 // pred_check
          %p378 = pneg %p192
        $region34: #{tpu_custom_call.1} parent=11 // pred_check_branch
          %380 = sbr.rel (%p378) target = $region36
        $region35: #{tpu_custom_call.1} parent=11 // pred_region
          %s382 = ssub.s32 16, 16
          %383 = vsyncadd [#allocation15], %s382
          %s385 = sshll.u32 [#allocation16], 4
          %s386 = int_to_ptr.vmem [resolvable:$true] %s385
          %388 = dma.hbm_to_vmem [thread:$0]  %s6, 16, %s386, [#allocation15]
        $region36: #{tpu_custom_call.1} parent=11 // pred_fallthru
          _
        // Predicated region
        $region37: #{tpu_custom_call.1} parent=11 // pred_check
          %p389 = pneg %p213
        $region38: #{tpu_custom_call.1} parent=11 // pred_check_branch
          %391 = sbr.rel (%p389) target = $region40
        $region39: #{tpu_custom_call.1} parent=11 // pred_region
          %s393 = ssub.s32 256, 256
          %394 = vsyncadd [#allocation18], %s393
          %s395 = sshll.u32 [#allocation17], 4
          %s396 = int_to_ptr.vmem [resolvable:$true] %s395
          %401 = dma.hbm_to_vmem [thread:$0]  %s7, 256, %s396, [#allocation18], 64, 64, 4
        $region40: #{tpu_custom_call.1} parent=11 // pred_fallthru
          _
        // Predicated region
        $region41: #{tpu_custom_call.1} parent=11 // pred_check
          %p402 = pneg %p234
        $region42: #{tpu_custom_call.1} parent=11 // pred_check_branch
          %404 = sbr.rel (%p402) target = $region44
        $region43: #{tpu_custom_call.1} parent=11 // pred_region
          %s406 = ssub.s32 16, 16
          %407 = vsyncadd [#allocation18], %s406
          %s409 = sshll.u32 [#allocation19], 4
          %s410 = int_to_ptr.vmem [resolvable:$true] %s409
          %412 = dma.hbm_to_vmem [thread:$0]  %s8, 16, %s410, [#allocation18]
        $region44: #{tpu_custom_call.1} parent=11 // pred_fallthru
          _
        // Predicated region
        $region45: #{tpu_custom_call.1} parent=11 // pred_check
          %p413 = pneg %p255
        $region46: #{tpu_custom_call.1} parent=11 // pred_check_branch
          %415 = sbr.rel (%p413) target = $region48
        $region47: #{tpu_custom_call.1} parent=11 // pred_region
          %s417 = ssub.s32 256, 256
          %418 = vsyncadd [#allocation21], %s417
          %s419 = sshll.u32 [#allocation20], 4
          %s420 = int_to_ptr.vmem [resolvable:$true] %s419
          %425 = dma.hbm_to_vmem [thread:$0]  %s9, 256, %s420, [#allocation21], 64, 64, 4
        $region48: #{tpu_custom_call.1} parent=11 // pred_fallthru
          _
        // Predicated region
        $region49: #{tpu_custom_call.1} parent=11 // pred_check
          %p426 = pneg %p276
        $region50: #{tpu_custom_call.1} parent=11 // pred_check_branch
          %428 = sbr.rel (%p426) target = $region52
        $region51: #{tpu_custom_call.1} parent=11 // pred_region
          %s430 = ssub.s32 16, 16
          %431 = vsyncadd [#allocation21], %s430
          %s433 = sshll.u32 [#allocation22], 4
          %s434 = int_to_ptr.vmem [resolvable:$true] %s433
          %436 = dma.hbm_to_vmem [thread:$0]  %s10, 16, %s434, [#allocation21]
        $region52: #{tpu_custom_call.1} parent=11 // pred_fallthru
          _
      $region12: #{tpu_custom_call.1} parent=5 // pred_fallthru
        _
      %p437 = scmp.lt.s32.totalorder %s28, 2
      // Predicated region
      $region53: #{tpu_custom_call.1} parent=5 // pred_check
        %p438 = pneg %p437
      $region54: #{tpu_custom_call.1} parent=5 // pred_check_branch
        %440 = sbr.rel (%p438) target = $region56
      $region55: #{tpu_custom_call.1} parent=5 // pred_region
        // Predicated region
        $region57: #{tpu_custom_call.1} parent=55 // pred_check
          %p441 = pneg %p60
        $region58: #{tpu_custom_call.1} parent=55 // pred_check_branch
          %443 = sbr.rel (%p441) target = $region60
        $region59: #{tpu_custom_call.1} parent=55 // pred_region
          %s444 = sand.u32 %s50, 1
          %s445 = scalar_lea.sflag [#allocation6], %s444
          %s446 = sand.u32 %s50, 1
          %s447 = smul.addr %s446, 8
          %s448 = scalar_lea.vmem [#allocation5], %s447
          %s450 = ssub.s32 128, 128
          %451 = vsyncadd %s445, %s450
          %s452 = smul.addr %s35, 128
          %s453 = scalar_lea.hbm %s0, %s452
          %s455 = sshll.u32 %s448, 4
          %s456 = int_to_ptr.vmem [resolvable:$true] %s455
          %458 = dma.hbm_to_vmem [thread:$0]  %s453, 128, %s456, %s445
        $region60: #{tpu_custom_call.1} parent=55 // pred_fallthru
          _
      $region56: #{tpu_custom_call.1} parent=5 // pred_fallthru
        _
      %p459 = scmp.le.s32.totalorder 1, %s28
      %p460 = scmp.lt.s32.totalorder %s28, 3
      %p461 = pnand %p459, %p460
      %p462 = pneg %p461
      // Predicated region
      $region61: #{tpu_custom_call.1} parent=5 // pred_check
        _
      $region62: #{tpu_custom_call.1} parent=5 // pred_check_branch
        %464 = sbr.rel (%p461) target = $region64
      $region63: #{tpu_custom_call.1} parent=5 // pred_region
        %s465 = ssub.s32 %s28, 1
        %s466 = sand.u32 %s53, 1
        %s467 = scalar_lea.sflag [#allocation6], %s466
        %s468 = sand.u32 %s53, 1
        %s469 = smul.addr %s468, 8
        %s470 = scalar_lea.vmem [#allocation5], %s469
        // Predicated region
        $region65: #{tpu_custom_call.1} parent=63 // pred_check
          %p471 = pneg %p66
        $region66: #{tpu_custom_call.1} parent=63 // pred_check_branch
          %473 = sbr.rel (%p471) target = $region68
        $region67: #{tpu_custom_call.1} parent=63 // pred_region
          %474 = dma.done %s467, 128
        $region68: #{tpu_custom_call.1} parent=63 // pred_fallthru
          _
        // Predicated region
        $region69: #{tpu_custom_call.1} parent=63 // pred_check
          %p475 = pneg %p87
        $region70: #{tpu_custom_call.1} parent=63 // pred_check_branch
          %477 = sbr.rel (%p475) target = $region72
        $region71: #{tpu_custom_call.1} parent=63 // pred_region
          %478 = dma.done [#allocation9], 16
        $region72: #{tpu_custom_call.1} parent=63 // pred_fallthru
          _
        // Predicated region
        $region73: #{tpu_custom_call.1} parent=63 // pred_check
          %p479 = pneg %p108
        $region74: #{tpu_custom_call.1} parent=63 // pred_check_branch
          %481 = sbr.rel (%p479) target = $region76
        $region75: #{tpu_custom_call.1} parent=63 // pred_region
          %482 = dma.done [#allocation9], 16
        $region76: #{tpu_custom_call.1} parent=63 // pred_fallthru
          _
        // Predicated region
        $region77: #{tpu_custom_call.1} parent=63 // pred_check
          %p483 = pneg %p129
        $region78: #{tpu_custom_call.1} parent=63 // pred_check_branch
          %485 = sbr.rel (%p483) target = $region80
        $region79: #{tpu_custom_call.1} parent=63 // pred_region
          %486 = dma.done [#allocation12], 256
        $region80: #{tpu_custom_call.1} parent=63 // pred_fallthru
          _
        // Predicated region
        $region81: #{tpu_custom_call.1} parent=63 // pred_check
          %p487 = pneg %p150
        $region82: #{tpu_custom_call.1} parent=63 // pred_check_branch
          %489 = sbr.rel (%p487) target = $region84
        $region83: #{tpu_custom_call.1} parent=63 // pred_region
          %490 = dma.done [#allocation12], 16
        $region84: #{tpu_custom_call.1} parent=63 // pred_fallthru
          _
        // Predicated region
        $region85: #{tpu_custom_call.1} parent=63 // pred_check
          %p491 = pneg %p171
        $region86: #{tpu_custom_call.1} parent=63 // pred_check_branch
          %493 = sbr.rel (%p491) target = $region88
        $region87: #{tpu_custom_call.1} parent=63 // pred_region
          %494 = dma.done [#allocation15], 256
        $region88: #{tpu_custom_call.1} parent=63 // pred_fallthru
          _
        // Predicated region
        $region89: #{tpu_custom_call.1} parent=63 // pred_check
          %p495 = pneg %p192
        $region90: #{tpu_custom_call.1} parent=63 // pred_check_branch
          %497 = sbr.rel (%p495) target = $region92
        $region91: #{tpu_custom_call.1} parent=63 // pred_region
          %498 = dma.done [#allocation15], 16
        $region92: #{tpu_custom_call.1} parent=63 // pred_fallthru
          _
        // Predicated region
        $region93: #{tpu_custom_call.1} parent=63 // pred_check
          %p499 = pneg %p213
        $region94: #{tpu_custom_call.1} parent=63 // pred_check_branch
          %501 = sbr.rel (%p499) target = $region96
        $region95: #{tpu_custom_call.1} parent=63 // pred_region
          %502 = dma.done [#allocation18], 256
        $region96: #{tpu_custom_call.1} parent=63 // pred_fallthru
          _
        // Predicated region
        $region97: #{tpu_custom_call.1} parent=63 // pred_check
          %p503 = pneg %p234
        $region98: #{tpu_custom_call.1} parent=63 // pred_check_branch
          %505 = sbr.rel (%p503) target = $region100
        $region99: #{tpu_custom_call.1} parent=63 // pred_region
          %506 = dma.done [#allocation18], 16
        $region100: #{tpu_custom_call.1} parent=63 // pred_fallthru
          _
        // Predicated region
        $region101: #{tpu_custom_call.1} parent=63 // pred_check
          %p507 = pneg %p255
        $region102: #{tpu_custom_call.1} parent=63 // pred_check_branch
          %509 = sbr.rel (%p507) target = $region104
        $region103: #{tpu_custom_call.1} parent=63 // pred_region
          %510 = dma.done [#allocation21], 256
        $region104: #{tpu_custom_call.1} parent=63 // pred_fallthru
          _
        // Predicated region
        $region105: #{tpu_custom_call.1} parent=63 // pred_check
          %p511 = pneg %p276
        $region106: #{tpu_custom_call.1} parent=63 // pred_check_branch
          %513 = sbr.rel (%p511) target = $region108
        $region107: #{tpu_custom_call.1} parent=63 // pred_region
          %514 = dma.done [#allocation21], 16
        $region108: #{tpu_custom_call.1} parent=63 // pred_fallthru
          _
        %s515 = sand.u32 %s53, 1
        %s516 = scalar_lea.sflag [#allocation6], %s515
        %s517 = sand.u32 %s53, 1
        %s518 = smul.addr %s517, 8
        %s519 = scalar_lea.vmem [#allocation5], %s518
        %p520 = pneg %p66
        %p521 = pneg %p63
        %p522 = pneg %p87
        %p523 = pneg %p84
        %p524 = pneg %p108
        %p525 = pneg %p105
        %p526 = pneg %p129
        %p527 = pneg %p126
        %p528 = pneg %p150
        %p529 = pneg %p147
        %p530 = pneg %p171
        %p531 = pneg %p168
        %p532 = pneg %p192
        %p533 = pneg %p189
        %p534 = pneg %p213
        %p535 = pneg %p210
        %p536 = pneg %p234
        %p537 = pneg %p231
        %p538 = pneg %p255
        %p539 = pneg %p252
        %p540 = pneg %p276
        %p541 = pneg %p273
        %p542 = pneg %p304
        %p543 = pneg %p301
        %s544 = sand.u32 %s291, 1
        %s545 = scalar_lea.sflag [#allocation7], %s544
        %s546 = sand.u32 %s291, 1
        %s547 = smul.addr %s546, 4
        %s548 = scalar_lea.vmem [#allocation23], %s547
        %p550 = scmp.eq.s32.totalorder %s38, 0
        // Predicated region
        $region109: #{tpu_custom_call.1} parent=63 // pred_check
          %p551 = pneg %p550
        $region110: #{tpu_custom_call.1} parent=63 // pred_check_branch
          %553 = sbr.rel (%p551) target = $region112
        $region111: #{tpu_custom_call.1} parent=63 // pred_region
          %v554 = vld [vmem:[%s470] sm:$0xff]
          %v555 = vld [vmem:[#allocation8] sm:$0x1]
          %v556 = vld [vmem:[#allocation10] sm:$0x1]
          %vm557 = vcmask 261120
          %v558 = vsel %vm557, %v554, 0.0
          %559 = vadd.xlane.f32.xlu0 %v558
          %v560 = vpop.xlane.xlu0 %559
          %v561 = vrcp.pop 32.0
          %v562 = vmul.f32 %v560, %v561
          %v563 = vsub.f32 %v554, %v562
          %v564 = vmul.f32 %v563, %v563
          %v565 = vsel %vm557, %v564, 0.0
          %566 = vadd.xlane.f32.xlu0 %v565
          %v567 = vpop.xlane.xlu0 %566
          %v568 = vmul.f32 %v567, %v561
          %v569 = vadd.f32 %v568, 1e-05
          %v570 = vrsqrt.pop %v569
          %v571 = vmul.f32 %v563, %v570
          %v573 = vlaneseq
          %v574 = vshrl.u32 %v573, 7
          %v575 = vsub.s32 0, %v574
          %v576 = vrot.slane %v555, %v575
          %v578 = vmul.f32 %v571, %v576
          %v580 = vlaneseq
          %v581 = vshrl.u32 %v580, 7
          %v582 = vsub.s32 0, %v581
          %v583 = vrot.slane %v556, %v582
          %v585 = vadd.f32 %v578, %v583
          %v586 = vpack.c.bf16 %v585, %v585
          %vm587 = vcmask 257024
          %588 = vst.msk [vmem:[#allocation2] sm:$0xf] %vm587, %v586
          %v589 = vld [vmem:[#allocation14] sm:$0xf]
          %v590 = vld [vmem:[#allocation14 + $0x4] sm:$0xf]
          %v591 = vld [vmem:[#allocation14 + $0x8] sm:$0xf]
          %v592 = vld [vmem:[#allocation14 + $0xc] sm:$0xf]
          %v593 = vld [vmem:[#allocation16] sm:$0x1]
          %v595 = vlaneseq
          %v596 = vshrl.u32 %v595, 7
          %v597 = vsub.s32 0, %v596
          %v598 = vrot.slane %v593, %v597
          %v604 = vunpack.c.l.b16 %v589
          %v605 = vunpack.c.l.b16 %v590
          %v606 = vunpack.c.l.b16 %v591
          %v607 = vunpack.c.l.b16 %v592
          %v608 = vpack.c.b16 %v605, %v604
          %v609 = vpack.c.b16 %v607, %v606
          %v613 = vsel %vm557, %v586, 0
          %615 = vmatprep.subr.bf16.mxu0 0
          %616 = vmatpush1.bf16.msra.mxu0 %v608
          %617 = vmatprep.subr.bf16.mxu0 0
          %618 = vmatpush1.bf16.msra.mxu0 %v609
          %619 = vmatprep.subr.bf16.mxu0 0
          %620 = vmatpush1.bf16.msra.mxu0 0
          %621 = vmatprep.subr.bf16.mxu0 0
          %622 = vmatpush1.bf16.msra.mxu0 0
          %623 = vmatprep.subr.bf16.mxu0 0
          %624 = vmatpush1.bf16.msra.mxu0 0
          %625 = vmatprep.subr.bf16.mxu0 0
          %626 = vmatpush1.bf16.msra.mxu0 0
          %627 = vmatprep.subr.bf16.mxu0 0
          %628 = vmatpush1.bf16.msra.mxu0 0
          %629 = vmatprep.subr.bf16.mxu0 0
          %630 = vmatpush1.bf16.msra.mxu0 0
          %631 = vmatprep.subr.bf16.mxu0 0
          %632 = vmatpush1.bf16.msra.mxu0 0
          %633 = vmatprep.subr.bf16.mxu0 0
          %634 = vmatpush1.bf16.msra.mxu0 0
          %635 = vmatprep.subr.bf16.mxu0 0
          %636 = vmatpush1.bf16.msra.mxu0 0
          %637 = vmatprep.subr.bf16.mxu0 0
          %638 = vmatpush1.bf16.msra.mxu0 0
          %639 = vmatprep.subr.bf16.mxu0 0
          %640 = vmatpush1.bf16.msra.mxu0 0
          %641 = vmatprep.subr.bf16.mxu0 0
          %642 = vmatpush1.bf16.msra.mxu0 0
          %643 = vmatprep.subr.bf16.mxu0 0
          %644 = vmatpush1.bf16.msra.mxu0 0
          %645 = vmatprep.subr.bf16.mxu0 0
          %646 = vmatpush1.bf16.msra.mxu0 0
          %647 = vmatprep.mubr.bf16.mxu0 0
          %648 = vmatmul.mubr.bf16.gmra.mrb[0].mxu0 %v613
          %v649 = vpop.f32.mrb[0].mxu0
          %v650 = vadd.f32 %v598, %v649
          %v651 = vpop.f32.mrb[0].mxu0
          %v652 = vpop.f32.mrb[0].mxu0
          %v653 = vpop.f32.mrb[0].mxu0
          %654 = vdwg.mxu0
          %v655 = vpack.c.bf16 %v650, %v650
          %656 = vst.msk [vmem:[#allocation3] sm:$0xf] %vm587, %v655
          %v657 = vld [vmem:[#allocation17] sm:$0xf]
          %v658 = vld [vmem:[#allocation17 + $0x4] sm:$0xf]
          %v659 = vld [vmem:[#allocation17 + $0x8] sm:$0xf]
          %v660 = vld [vmem:[#allocation17 + $0xc] sm:$0xf]
          %v661 = vld [vmem:[#allocation19] sm:$0x1]
          %v663 = vlaneseq
          %v664 = vshrl.u32 %v663, 7
          %v665 = vsub.s32 0, %v664
          %v666 = vrot.slane %v661, %v665
          %v672 = vunpack.c.l.b16 %v657
          %v673 = vunpack.c.l.b16 %v658
          %v674 = vunpack.c.l.b16 %v659
          %v675 = vunpack.c.l.b16 %v660
          %v676 = vpack.c.b16 %v673, %v672
          %v677 = vpack.c.b16 %v675, %v674
          %680 = vmatprep.subr.bf16.mxu0 0
          %681 = vmatpush1.bf16.msra.mxu0 %v676
          %682 = vmatprep.subr.bf16.mxu0 0
          %683 = vmatpush1.bf16.msra.mxu0 %v677
          %684 = vmatprep.subr.bf16.mxu0 0
          %685 = vmatpush1.bf16.msra.mxu0 0
          %686 = vmatprep.subr.bf16.mxu0 0
          %687 = vmatpush1.bf16.msra.mxu0 0
          %688 = vmatprep.subr.bf16.mxu0 0
          %689 = vmatpush1.bf16.msra.mxu0 0
          %690 = vmatprep.subr.bf16.mxu0 0
          %691 = vmatpush1.bf16.msra.mxu0 0
          %692 = vmatprep.subr.bf16.mxu0 0
          %693 = vmatpush1.bf16.msra.mxu0 0
          %694 = vmatprep.subr.bf16.mxu0 0
          %695 = vmatpush1.bf16.msra.mxu0 0
          %696 = vmatprep.subr.bf16.mxu0 0
          %697 = vmatpush1.bf16.msra.mxu0 0
          %698 = vmatprep.subr.bf16.mxu0 0
          %699 = vmatpush1.bf16.msra.mxu0 0
          %700 = vmatprep.subr.bf16.mxu0 0
          %701 = vmatpush1.bf16.msra.mxu0 0
          %702 = vmatprep.subr.bf16.mxu0 0
          %703 = vmatpush1.bf16.msra.mxu0 0
          %704 = vmatprep.subr.bf16.mxu0 0
          %705 = vmatpush1.bf16.msra.mxu0 0
          %706 = vmatprep.subr.bf16.mxu0 0
          %707 = vmatpush1.bf16.msra.mxu0 0
          %708 = vmatprep.subr.bf16.mxu0 0
          %709 = vmatpush1.bf16.msra.mxu0 0
          %710 = vmatprep.subr.bf16.mxu0 0
          %711 = vmatpush1.bf16.msra.mxu0 0
          %712 = vmatprep.mubr.bf16.mxu0 0
          %713 = vmatmul.mubr.bf16.gmra.mrb[0].mxu0 %v613
          %v714 = vpop.f32.mrb[0].mxu0
          %v715 = vadd.f32 %v666, %v714
          %v716 = vpop.f32.mrb[0].mxu0
          %v717 = vpop.f32.mrb[0].mxu0
          %v718 = vpop.f32.mrb[0].mxu0
          %719 = vdwg.mxu0
          %v720 = vpack.c.bf16 %v715, %v715
          %721 = vst.msk [vmem:[#allocation4] sm:$0xf] %vm587, %v720
        $region112: #{tpu_custom_call.1} parent=63 // pred_fallthru
          _
        %s722 = smul.u32 %s38, 8
        %s723 = scalar_lea.vmem %s470, %s722 [#allocation5]
        %v724 = vld [vmem:[%s723] sm:$0xff]
        %s725 = sshra.s32 %s722, 3
        %s726 = sand.u32 %s722, 7
        %s727 = smul.addr %s725, 4
        %s728 = scalar_lea.vmem [#allocation2], %s727
        %v729 = vld [vmem:[%s728] sm:$0xf]
        %v730 = vlaneseq
        %v731 = vshrl.u32 %v730, 7
        %v732 = vstv %s722
        %v733 = vadd.s32 %v732, %v731
        %v734 = vlaneseq
        %v735 = vand.u32 %v734, 127
        %vm736 = vcmp.le.s32.totalorder %v735, %v733
        %v737 = vld [vmem:[#allocation3] sm:$0xf]
        %v738 = vld [vmem:[#allocation4] sm:$0xf]
        %v739 = vld [vmem:[#allocation11] sm:$0xf]
        %v740 = vld [vmem:[#allocation11 + $0x4] sm:$0xf]
        %v741 = vld [vmem:[#allocation11 + $0x8] sm:$0xf]
        %v742 = vld [vmem:[#allocation11 + $0xc] sm:$0xf]
        %v743 = vld [vmem:[#allocation13] sm:$0x1]
        %v745 = vlaneseq
        %v746 = vshrl.u32 %v745, 7
        %v747 = vsub.s32 0, %v746
        %v748 = vrot.slane %v743, %v747
        %v754 = vunpack.c.l.b16 %v739
        %v755 = vunpack.c.l.b16 %v740
        %v756 = vunpack.c.l.b16 %v741
        %v757 = vunpack.c.l.b16 %v742
        %v758 = vpack.c.b16 %v755, %v754
        %v759 = vpack.c.b16 %v757, %v756
        %vm762 = vcmask 261120
        %v764 = vsel %vm762, %v729, 0
        %766 = vmatprep.subr.bf16.mxu0 0
        %767 = vmatpush1.bf16.msra.mxu0 %v758
        %768 = vmatprep.subr.bf16.mxu0 0
        %769 = vmatpush1.bf16.msra.mxu0 %v759
        %770 = vmatprep.subr.bf16.mxu0 0
        %771 = vmatpush1.bf16.msra.mxu0 0
        %772 = vmatprep.subr.bf16.mxu0 0
        %773 = vmatpush1.bf16.msra.mxu0 0
        %774 = vmatprep.subr.bf16.mxu0 0
        %775 = vmatpush1.bf16.msra.mxu0 0
        %776 = vmatprep.subr.bf16.mxu0 0
        %777 = vmatpush1.bf16.msra.mxu0 0
        %778 = vmatprep.subr.bf16.mxu0 0
        %779 = vmatpush1.bf16.msra.mxu0 0
        %780 = vmatprep.subr.bf16.mxu0 0
        %781 = vmatpush1.bf16.msra.mxu0 0
        %782 = vmatprep.subr.bf16.mxu0 0
        %783 = vmatpush1.bf16.msra.mxu0 0
        %784 = vmatprep.subr.bf16.mxu0 0
        %785 = vmatpush1.bf16.msra.mxu0 0
        %786 = vmatprep.subr.bf16.mxu0 0
        %787 = vmatpush1.bf16.msra.mxu0 0
        %788 = vmatprep.subr.bf16.mxu0 0
        %789 = vmatpush1.bf16.msra.mxu0 0
        %790 = vmatprep.subr.bf16.mxu0 0
        %791 = vmatpush1.bf16.msra.mxu0 0
        %792 = vmatprep.subr.bf16.mxu0 0
        %793 = vmatpush1.bf16.msra.mxu0 0
        %794 = vmatprep.subr.bf16.mxu0 0
        %795 = vmatpush1.bf16.msra.mxu0 0
        %796 = vmatprep.subr.bf16.mxu0 0
        %797 = vmatpush1.bf16.msra.mxu0 0
        %798 = vmatprep.mubr.bf16.mxu0 0
        %799 = vmatmul.mubr.bf16.gmra.mrb[0].mxu0 %v764
        %v800 = vpop.f32.mrb[0].mxu0
        %v801 = vadd.f32 %v748, %v800
        %v802 = vpop.f32.mrb[0].mxu0
        %v803 = vpop.f32.mrb[0].mxu0
        %v804 = vpop.f32.mrb[0].mxu0
        %805 = vdwg.mxu0
        %v806 = vpack.c.bf16 %v801, %v801
        %vm807 = vcmask 64512
        %v809 = vsel %vm807, %v806, 0
        %v812 = vsel %vm807, %v737, 0
        %814 = vmatprep.subr.bf16.mxu0 0
        %815 = vmatpush1.bf16.xpose.msra.mxu0 %v812
        %816 = vmatprep.subr.bf16.mxu0 0
        %817 = vmatpush1.bf16.xpose.msra.mxu0 0
        %818 = vmatprep.subr.bf16.mxu0 0
        %819 = vmatpush1.bf16.xpose.msra.mxu0 0
        %820 = vmatprep.subr.bf16.mxu0 0
        %821 = vmatpush1.bf16.xpose.msra.mxu0 0
        %822 = vmatprep.subr.bf16.mxu0 0
        %823 = vmatpush1.bf16.xpose.msra.mxu0 0
        %824 = vmatprep.subr.bf16.mxu0 0
        %825 = vmatpush1.bf16.xpose.msra.mxu0 0
        %826 = vmatprep.subr.bf16.mxu0 0
        %827 = vmatpush1.bf16.xpose.msra.mxu0 0
        %828 = vmatprep.subr.bf16.mxu0 0
        %829 = vmatpush1.bf16.xpose.msra.mxu0 0
        %830 = vmatprep.subr.bf16.mxu0 0
        %831 = vmatpush1.bf16.xpose.msra.mxu0 0
        %832 = vmatprep.subr.bf16.mxu0 0
        %833 = vmatpush1.bf16.xpose.msra.mxu0 0
        %834 = vmatprep.subr.bf16.mxu0 0
        %835 = vmatpush1.bf16.xpose.msra.mxu0 0
        %836 = vmatprep.subr.bf16.mxu0 0
        %837 = vmatpush1.bf16.xpose.msra.mxu0 0
        %838 = vmatprep.subr.bf16.mxu0 0
        %839 = vmatpush1.bf16.xpose.msra.mxu0 0
        %840 = vmatprep.subr.bf16.mxu0 0
        %841 = vmatpush1.bf16.xpose.msra.mxu0 0
        %842 = vmatprep.subr.bf16.mxu0 0
        %843 = vmatpush1.bf16.xpose.msra.mxu0 0
        %844 = vmatprep.subr.bf16.mxu0 0
        %845 = vmatpush1.bf16.xpose.msra.mxu0 0
        %846 = vmatprep.mubr.bf16.mxu0 0
        %847 = vmatmul.mubr.bf16.gmra.mrb[0].mxu0 %v809
        %v848 = vpop.f32.mrb[0].mxu0
        %v849 = vadd.f32 0.0, %v848
        %v850 = vpop.f32.mrb[0].mxu0
        %v851 = vpop.f32.mrb[0].mxu0
        %v852 = vpop.f32.mrb[0].mxu0
        %853 = vdwg.mxu0
        %v854 = vmul.f32 %v849, 0.35355338
        %v855 = vsel %vm736, %v854, -1e+09
        %v856 = vsel %vm807, %v855, -inf
        %857 = vmax.xlane.f32.xlu0 %v856
        %v858 = vpop.xlane.xlu0 %857
        %v859 = vsub.f32 %v855, %v858
        %v860 = vmul.f32 %v859, 1.442695
        %v861 = vpow.pop %v860
        %v862 = vsel %vm807, %v861, 0.0
        %863 = vadd.xlane.f32.xlu0 %v862
        %v864 = vpop.xlane.xlu0 %863
        %v865 = vrcp.pop %v864
        %v866 = vmul.f32 %v861, %v865
        %v867 = vpack.c.bf16 %v866, %v866
        %v869 = vsel %vm807, %v867, 0
        %vm871 = vcmask 1043456
        %v873 = vsel %vm871, %v738, 0
        %875 = vmatprep.subr.bf16.mxu0 0
        %876 = vmatpush1.bf16.msra.mxu0 %v873
        %877 = vmatprep.subr.bf16.mxu0 0
        %878 = vmatpush1.bf16.msra.mxu0 0
        %879 = vmatprep.subr.bf16.mxu0 0
        %880 = vmatpush1.bf16.msra.mxu0 0
        %881 = vmatprep.subr.bf16.mxu0 0
        %882 = vmatpush1.bf16.msra.mxu0 0
        %883 = vmatprep.subr.bf16.mxu0 0
        %884 = vmatpush1.bf16.msra.mxu0 0
        %885 = vmatprep.subr.bf16.mxu0 0
        %886 = vmatpush1.bf16.msra.mxu0 0
        %887 = vmatprep.subr.bf16.mxu0 0
        %888 = vmatpush1.bf16.msra.mxu0 0
        %889 = vmatprep.subr.bf16.mxu0 0
        %890 = vmatpush1.bf16.msra.mxu0 0
        %891 = vmatprep.subr.bf16.mxu0 0
        %892 = vmatpush1.bf16.msra.mxu0 0
        %893 = vmatprep.subr.bf16.mxu0 0
        %894 = vmatpush1.bf16.msra.mxu0 0
        %895 = vmatprep.subr.bf16.mxu0 0
        %896 = vmatpush1.bf16.msra.mxu0 0
        %897 = vmatprep.subr.bf16.mxu0 0
        %898 = vmatpush1.bf16.msra.mxu0 0
        %899 = vmatprep.subr.bf16.mxu0 0
        %900 = vmatpush1.bf16.msra.mxu0 0
        %901 = vmatprep.subr.bf16.mxu0 0
        %902 = vmatpush1.bf16.msra.mxu0 0
        %903 = vmatprep.subr.bf16.mxu0 0
        %904 = vmatpush1.bf16.msra.mxu0 0
        %905 = vmatprep.subr.bf16.mxu0 0
        %906 = vmatpush1.bf16.msra.mxu0 0
        %907 = vmatprep.mubr.bf16.mxu0 0
        %908 = vmatmul.mubr.bf16.gmra.mrb[0].mxu0 %v869
        %v909 = vpop.f32.mrb[0].mxu0
        %v910 = vadd.f32 0.0, %v909
        %v911 = vpop.f32.mrb[0].mxu0
        %v912 = vpop.f32.mrb[0].mxu0
        %v913 = vpop.f32.mrb[0].mxu0
        %914 = vdwg.mxu0
        %916 = vrot.lane.b32.xlu0 %v806, 120
        %v917 = vpop.permute.xlu0 %916
        %v919 = vunpack.c.l.b16 %v737
        %v920 = vpack.c.b16 %v919, %v919
        %921 = vrot.lane.b32.xlu0 %v920, 120
        %v922 = vpop.permute.xlu0 %921
        %v924 = vsel %vm807, %v917, 0
        %v927 = vsel %vm807, %v922, 0
        %929 = vmatprep.subr.bf16.mxu0 0
        %930 = vmatpush1.bf16.xpose.msra.mxu0 %v927
        %931 = vmatprep.subr.bf16.mxu0 0
        %932 = vmatpush1.bf16.xpose.msra.mxu0 0
        %933 = vmatprep.subr.bf16.mxu0 0
        %934 = vmatpush1.bf16.xpose.msra.mxu0 0
        %935 = vmatprep.subr.bf16.mxu0 0
        %936 = vmatpush1.bf16.xpose.msra.mxu0 0
        %937 = vmatprep.subr.bf16.mxu0 0
        %938 = vmatpush1.bf16.xpose.msra.mxu0 0
        %939 = vmatprep.subr.bf16.mxu0 0
        %940 = vmatpush1.bf16.xpose.msra.mxu0 0
        %941 = vmatprep.subr.bf16.mxu0 0
        %942 = vmatpush1.bf16.xpose.msra.mxu0 0
        %943 = vmatprep.subr.bf16.mxu0 0
        %944 = vmatpush1.bf16.xpose.msra.mxu0 0
        %945 = vmatprep.subr.bf16.mxu0 0
        %946 = vmatpush1.bf16.xpose.msra.mxu0 0
        %947 = vmatprep.subr.bf16.mxu0 0
        %948 = vmatpush1.bf16.xpose.msra.mxu0 0
        %949 = vmatprep.subr.bf16.mxu0 0
        %950 = vmatpush1.bf16.xpose.msra.mxu0 0
        %951 = vmatprep.subr.bf16.mxu0 0
        %952 = vmatpush1.bf16.xpose.msra.mxu0 0
        %953 = vmatprep.subr.bf16.mxu0 0
        %954 = vmatpush1.bf16.xpose.msra.mxu0 0
        %955 = vmatprep.subr.bf16.mxu0 0
        %956 = vmatpush1.bf16.xpose.msra.mxu0 0
        %957 = vmatprep.subr.bf16.mxu0 0
        %958 = vmatpush1.bf16.xpose.msra.mxu0 0
        %959 = vmatprep.subr.bf16.mxu0 0
        %960 = vmatpush1.bf16.xpose.msra.mxu0 0
        %961 = vmatprep.mubr.bf16.mxu0 0
        %962 = vmatmul.mubr.bf16.gmra.mrb[0].mxu0 %v924
        %v963 = vpop.f32.mrb[0].mxu0
        %v964 = vadd.f32 0.0, %v963
        %v965 = vpop.f32.mrb[0].mxu0
        %v966 = vpop.f32.mrb[0].mxu0
        %v967 = vpop.f32.mrb[0].mxu0
        %968 = vdwg.mxu0
        %v969 = vmul.f32 %v964, 0.35355338
        %v970 = vsel %vm736, %v969, -1e+09
        %v971 = vsel %vm807, %v970, -inf
        %972 = vmax.xlane.f32.xlu0 %v971
        %v973 = vpop.xlane.xlu0 %972
        %v974 = vsub.f32 %v970, %v973
        %v975 = vmul.f32 %v974, 1.442695
        %v976 = vpow.pop %v975
        %v977 = vsel %vm807, %v976, 0.0
        %978 = vadd.xlane.f32.xlu0 %v977
        %v979 = vpop.xlane.xlu0 %978
        %v980 = vrcp.pop %v979
        %v981 = vmul.f32 %v976, %v980
        %v982 = vpack.c.bf16 %v981, %v981
        %v984 = vunpack.c.l.b16 %v738
        %v985 = vpack.c.b16 %v984, %v984
        %986 = vrot.lane.b32.xlu0 %v985, 120
        %v987 = vpop.permute.xlu0 %986
        %v989 = vsel %vm807, %v982, 0
        %v992 = vsel %vm871, %v987, 0
        %994 = vmatprep.subr.bf16.mxu0 0
        %995 = vmatpush1.bf16.msra.mxu0 %v992
        %996 = vmatprep.subr.bf16.mxu0 0
        %997 = vmatpush1.bf16.msra.mxu0 0
        %998 = vmatprep.subr.bf16.mxu0 0
        %999 = vmatpush1.bf16.msra.mxu0 0
        %1000 = vmatprep.subr.bf16.mxu0 0
        %1001 = vmatpush1.bf16.msra.mxu0 0
        %1002 = vmatprep.subr.bf16.mxu0 0
        %1003 = vmatpush1.bf16.msra.mxu0 0
        %1004 = vmatprep.subr.bf16.mxu0 0
        %1005 = vmatpush1.bf16.msra.mxu0 0
        %1006 = vmatprep.subr.bf16.mxu0 0
        %1007 = vmatpush1.bf16.msra.mxu0 0
        %1008 = vmatprep.subr.bf16.mxu0 0
        %1009 = vmatpush1.bf16.msra.mxu0 0
        %1010 = vmatprep.subr.bf16.mxu0 0
        %1011 = vmatpush1.bf16.msra.mxu0 0
        %1012 = vmatprep.subr.bf16.mxu0 0
        %1013 = vmatpush1.bf16.msra.mxu0 0
        %1014 = vmatprep.subr.bf16.mxu0 0
        %1015 = vmatpush1.bf16.msra.mxu0 0
        %1016 = vmatprep.subr.bf16.mxu0 0
        %1017 = vmatpush1.bf16.msra.mxu0 0
        %1018 = vmatprep.subr.bf16.mxu0 0
        %1019 = vmatpush1.bf16.msra.mxu0 0
        %1020 = vmatprep.subr.bf16.mxu0 0
        %1021 = vmatpush1.bf16.msra.mxu0 0
        %1022 = vmatprep.subr.bf16.mxu0 0
        %1023 = vmatpush1.bf16.msra.mxu0 0
        %1024 = vmatprep.subr.bf16.mxu0 0
        %1025 = vmatpush1.bf16.msra.mxu0 0
        %1026 = vmatprep.mubr.bf16.mxu0 0
        %1027 = vmatmul.mubr.bf16.gmra.mrb[0].mxu0 %v989
        %v1028 = vpop.f32.mrb[0].mxu0
        %v1029 = vadd.f32 0.0, %v1028
        %v1030 = vpop.f32.mrb[0].mxu0
        %v1031 = vpop.f32.mrb[0].mxu0
        %v1032 = vpop.f32.mrb[0].mxu0
        %1033 = vdwg.mxu0
        %1034 = vrot.lane.b32.xlu0 %v806, 112
        %v1035 = vpop.permute.xlu0 %1034
        %1036 = vrot.lane.b32.xlu0 %v920, 112
        %v1037 = vpop.permute.xlu0 %1036
        %v1039 = vsel %vm807, %v1035, 0
        %v1042 = vsel %vm807, %v1037, 0
        %1044 = vmatprep.subr.bf16.mxu0 0
        %1045 = vmatpush1.bf16.xpose.msra.mxu0 %v1042
        %1046 = vmatprep.subr.bf16.mxu0 0
        %1047 = vmatpush1.bf16.xpose.msra.mxu0 0
        %1048 = vmatprep.subr.bf16.mxu0 0
        %1049 = vmatpush1.bf16.xpose.msra.mxu0 0
        %1050 = vmatprep.subr.bf16.mxu0 0
        %1051 = vmatpush1.bf16.xpose.msra.mxu0 0
        %1052 = vmatprep.subr.bf16.mxu0 0
        %1053 = vmatpush1.bf16.xpose.msra.mxu0 0
        %1054 = vmatprep.subr.bf16.mxu0 0
        %1055 = vmatpush1.bf16.xpose.msra.mxu0 0
        %1056 = vmatprep.subr.bf16.mxu0 0
        %1057 = vmatpush1.bf16.xpose.msra.mxu0 0
        %1058 = vmatprep.subr.bf16.mxu0 0
        %1059 = vmatpush1.bf16.xpose.msra.mxu0 0
        %1060 = vmatprep.subr.bf16.mxu0 0
        %1061 = vmatpush1.bf16.xpose.msra.mxu0 0
        %1062 = vmatprep.subr.bf16.mxu0 0
        %1063 = vmatpush1.bf16.xpose.msra.mxu0 0
        %1064 = vmatprep.subr.bf16.mxu0 0
        %1065 = vmatpush1.bf16.xpose.msra.mxu0 0
        %1066 = vmatprep.subr.bf16.mxu0 0
        %1067 = vmatpush1.bf16.xpose.msra.mxu0 0
        %1068 = vmatprep.subr.bf16.mxu0 0
        %1069 = vmatpush1.bf16.xpose.msra.mxu0 0
        %1070 = vmatprep.subr.bf16.mxu0 0
        %1071 = vmatpush1.bf16.xpose.msra.mxu0 0
        %1072 = vmatprep.subr.bf16.mxu0 0
        %1073 = vmatpush1.bf16.xpose.msra.mxu0 0
        %1074 = vmatprep.subr.bf16.mxu0 0
        %1075 = vmatpush1.bf16.xpose.msra.mxu0 0
        %1076 = vmatprep.mubr.bf16.mxu0 0
        %1077 = vmatmul.mubr.bf16.gmra.mrb[0].mxu0 %v1039
        %v1078 = vpop.f32.mrb[0].mxu0
        %v1079 = vadd.f32 0.0, %v1078
        %v1080 = vpop.f32.mrb[0].mxu0
        %v1081 = vpop.f32.mrb[0].mxu0
        %v1082 = vpop.f32.mrb[0].mxu0
        %1083 = vdwg.mxu0
        %v1084 = vmul.f32 %v1079, 0.35355338
        %v1085 = vsel %vm736, %v1084, -1e+09
        %v1086 = vsel %vm807, %v1085, -inf
        %1087 = vmax.xlane.f32.xlu0 %v1086
        %v1088 = vpop.xlane.xlu0 %1087
        %v1089 = vsub.f32 %v1085, %v1088
        %v1090 = vmul.f32 %v1089, 1.442695
        %v1091 = vpow.pop %v1090
        %v1092 = vsel %vm807, %v1091, 0.0
        %1093 = vadd.xlane.f32.xlu0 %v1092
        %v1094 = vpop.xlane.xlu0 %1093
        %v1095 = vrcp.pop %v1094
        %v1096 = vmul.f32 %v1091, %v1095
        %v1097 = vpack.c.bf16 %v1096, %v1096
        %1098 = vrot.lane.b32.xlu0 %v985, 112
        %v1099 = vpop.permute.xlu0 %1098
        %v1101 = vsel %vm807, %v1097, 0
        %v1104 = vsel %vm871, %v1099, 0
        %1106 = vmatprep.subr.bf16.mxu0 0
        %1107 = vmatpush1.bf16.msra.mxu0 %v1104
        %1108 = vmatprep.subr.bf16.mxu0 0
        %1109 = vmatpush1.bf16.msra.mxu0 0
        %1110 = vmatprep.subr.bf16.mxu0 0
        %1111 = vmatpush1.bf16.msra.mxu0 0
        %1112 = vmatprep.subr.bf16.mxu0 0
        %1113 = vmatpush1.bf16.msra.mxu0 0
        %1114 = vmatprep.subr.bf16.mxu0 0
        %1115 = vmatpush1.bf16.msra.mxu0 0
        %1116 = vmatprep.subr.bf16.mxu0 0
        %1117 = vmatpush1.bf16.msra.mxu0 0
        %1118 = vmatprep.subr.bf16.mxu0 0
        %1119 = vmatpush1.bf16.msra.mxu0 0
        %1120 = vmatprep.subr.bf16.mxu0 0
        %1121 = vmatpush1.bf16.msra.mxu0 0
        %1122 = vmatprep.subr.bf16.mxu0 0
        %1123 = vmatpush1.bf16.msra.mxu0 0
        %1124 = vmatprep.subr.bf16.mxu0 0
        %1125 = vmatpush1.bf16.msra.mxu0 0
        %1126 = vmatprep.subr.bf16.mxu0 0
        %1127 = vmatpush1.bf16.msra.mxu0 0
        %1128 = vmatprep.subr.bf16.mxu0 0
        %1129 = vmatpush1.bf16.msra.mxu0 0
        %1130 = vmatprep.subr.bf16.mxu0 0
        %1131 = vmatpush1.bf16.msra.mxu0 0
        %1132 = vmatprep.subr.bf16.mxu0 0
        %1133 = vmatpush1.bf16.msra.mxu0 0
        %1134 = vmatprep.subr.bf16.mxu0 0
        %1135 = vmatpush1.bf16.msra.mxu0 0
        %1136 = vmatprep.subr.bf16.mxu0 0
        %1137 = vmatpush1.bf16.msra.mxu0 0
        %1138 = vmatprep.mubr.bf16.mxu0 0
        %1139 = vmatmul.mubr.bf16.gmra.mrb[0].mxu0 %v1101
        %v1140 = vpop.f32.mrb[0].mxu0
        %v1141 = vadd.f32 0.0, %v1140
        %v1142 = vpop.f32.mrb[0].mxu0
        %v1143 = vpop.f32.mrb[0].mxu0
        %v1144 = vpop.f32.mrb[0].mxu0
        %1145 = vdwg.mxu0
        %1146 = vrot.lane.b32.xlu0 %v806, 104
        %v1147 = vpop.permute.xlu0 %1146
        %1148 = vrot.lane.b32.xlu0 %v920, 104
        %v1149 = vpop.permute.xlu0 %1148
        %v1151 = vsel %vm807, %v1147, 0
        %v1154 = vsel %vm807, %v1149, 0
        %1156 = vmatprep.subr.bf16.mxu0 0
        %1157 = vmatpush1.bf16.xpose.msra.mxu0 %v1154
        %1158 = vmatprep.subr.bf16.mxu0 0
        %1159 = vmatpush1.bf16.xpose.msra.mxu0 0
        %1160 = vmatprep.subr.bf16.mxu0 0
        %1161 = vmatpush1.bf16.xpose.msra.mxu0 0
        %1162 = vmatprep.subr.bf16.mxu0 0
        %1163 = vmatpush1.bf16.xpose.msra.mxu0 0
        %1164 = vmatprep.subr.bf16.mxu0 0
        %1165 = vmatpush1.bf16.xpose.msra.mxu0 0
        %1166 = vmatprep.subr.bf16.mxu0 0
        %1167 = vmatpush1.bf16.xpose.msra.mxu0 0
        %1168 = vmatprep.subr.bf16.mxu0 0
        %1169 = vmatpush1.bf16.xpose.msra.mxu0 0
        %1170 = vmatprep.subr.bf16.mxu0 0
        %1171 = vmatpush1.bf16.xpose.msra.mxu0 0
        %1172 = vmatprep.subr.bf16.mxu0 0
        %1173 = vmatpush1.bf16.xpose.msra.mxu0 0
        %1174 = vmatprep.subr.bf16.mxu0 0
        %1175 = vmatpush1.bf16.xpose.msra.mxu0 0
        %1176 = vmatprep.subr.bf16.mxu0 0
        %1177 = vmatpush1.bf16.xpose.msra.mxu0 0
        %1178 = vmatprep.subr.bf16.mxu0 0
        %1179 = vmatpush1.bf16.xpose.msra.mxu0 0
        %1180 = vmatprep.subr.bf16.mxu0 0
        %1181 = vmatpush1.bf16.xpose.msra.mxu0 0
        %1182 = vmatprep.subr.bf16.mxu0 0
        %1183 = vmatpush1.bf16.xpose.msra.mxu0 0
        %1184 = vmatprep.subr.bf16.mxu0 0
        %1185 = vmatpush1.bf16.xpose.msra.mxu0 0
        %1186 = vmatprep.subr.bf16.mxu0 0
        %1187 = vmatpush1.bf16.xpose.msra.mxu0 0
        %1188 = vmatprep.mubr.bf16.mxu0 0
        %1189 = vmatmul.mubr.bf16.gmra.mrb[0].mxu0 %v1151
        %v1190 = vpop.f32.mrb[0].mxu0
        %v1191 = vadd.f32 0.0, %v1190
        %v1192 = vpop.f32.mrb[0].mxu0
        %v1193 = vpop.f32.mrb[0].mxu0
        %v1194 = vpop.f32.mrb[0].mxu0
        %1195 = vdwg.mxu0
        %v1196 = vmul.f32 %v1191, 0.35355338
        %v1197 = vsel %vm736, %v1196, -1e+09
        %v1198 = vsel %vm807, %v1197, -inf
        %1199 = vmax.xlane.f32.xlu0 %v1198
        %v1200 = vpop.xlane.xlu0 %1199
        %v1201 = vsub.f32 %v1197, %v1200
        %v1202 = vmul.f32 %v1201, 1.442695
        %v1203 = vpow.pop %v1202
        %v1204 = vsel %vm807, %v1203, 0.0
        %1205 = vadd.xlane.f32.xlu0 %v1204
        %v1206 = vpop.xlane.xlu0 %1205
        %v1207 = vrcp.pop %v1206
        %v1208 = vmul.f32 %v1203, %v1207
        %v1209 = vpack.c.bf16 %v1208, %v1208
        %1210 = vrot.lane.b32.xlu0 %v985, 104
        %v1211 = vpop.permute.xlu0 %1210
        %v1213 = vsel %vm807, %v1209, 0
        %v1216 = vsel %vm871, %v1211, 0
        %1218 = vmatprep.subr.bf16.mxu0 0
        %1219 = vmatpush1.bf16.msra.mxu0 %v1216
        %1220 = vmatprep.subr.bf16.mxu0 0
        %1221 = vmatpush1.bf16.msra.mxu0 0
        %1222 = vmatprep.subr.bf16.mxu0 0
        %1223 = vmatpush1.bf16.msra.mxu0 0
        %1224 = vmatprep.subr.bf16.mxu0 0
        %1225 = vmatpush1.bf16.msra.mxu0 0
        %1226 = vmatprep.subr.bf16.mxu0 0
        %1227 = vmatpush1.bf16.msra.mxu0 0
        %1228 = vmatprep.subr.bf16.mxu0 0
        %1229 = vmatpush1.bf16.msra.mxu0 0
        %1230 = vmatprep.subr.bf16.mxu0 0
        %1231 = vmatpush1.bf16.msra.mxu0 0
        %1232 = vmatprep.subr.bf16.mxu0 0
        %1233 = vmatpush1.bf16.msra.mxu0 0
        %1234 = vmatprep.subr.bf16.mxu0 0
        %1235 = vmatpush1.bf16.msra.mxu0 0
        %1236 = vmatprep.subr.bf16.mxu0 0
        %1237 = vmatpush1.bf16.msra.mxu0 0
        %1238 = vmatprep.subr.bf16.mxu0 0
        %1239 = vmatpush1.bf16.msra.mxu0 0
        %1240 = vmatprep.subr.bf16.mxu0 0
        %1241 = vmatpush1.bf16.msra.mxu0 0
        %1242 = vmatprep.subr.bf16.mxu0 0
        %1243 = vmatpush1.bf16.msra.mxu0 0
        %1244 = vmatprep.subr.bf16.mxu0 0
        %1245 = vmatpush1.bf16.msra.mxu0 0
        %1246 = vmatprep.subr.bf16.mxu0 0
        %1247 = vmatpush1.bf16.msra.mxu0 0
        %1248 = vmatprep.subr.bf16.mxu0 0
        %1249 = vmatpush1.bf16.msra.mxu0 0
        %1250 = vmatprep.mubr.bf16.mxu0 0
        %1251 = vmatmul.mubr.bf16.gmra.mrb[0].mxu0 %v1213
        %v1252 = vpop.f32.mrb[0].mxu0
        %v1253 = vadd.f32 0.0, %v1252
        %v1254 = vpop.f32.mrb[0].mxu0
        %v1255 = vpop.f32.mrb[0].mxu0
        %v1256 = vpop.f32.mrb[0].mxu0
        %1257 = vdwg.mxu0
        %1259 = vrot.lane.b32.xlu0 %v1029, 8
        %v1260 = vpop.permute.xlu0 %1259
        %1263 = vrot.lane.b32.xlu0 %v1141, 16
        %v1264 = vpop.permute.xlu0 %1263
        %1267 = vrot.lane.b32.xlu0 %v1253, 24
        %v1268 = vpop.permute.xlu0 %1267
        %v1270 = vsel %vm807, %v910, %v1260
        %vm1271 = vcmask 130048
        %v1272 = vsel %vm1271, %v1270, %v1264
        %vm1273 = vcmask 195584
        %v1274 = vsel %vm1273, %v1272, %v1268
        %v1275 = vpack.c.bf16 %v1274, %v1274
        %v1276 = vld [vmem:[#allocation20] sm:$0xf]
        %v1277 = vld [vmem:[#allocation20 + $0x4] sm:$0xf]
        %v1278 = vld [vmem:[#allocation20 + $0x8] sm:$0xf]
        %v1279 = vld [vmem:[#allocation20 + $0xc] sm:$0xf]
        %v1280 = vld [vmem:[#allocation22] sm:$0x1]
        %v1282 = vlaneseq
        %v1283 = vshrl.u32 %v1282, 7
        %v1284 = vsub.s32 0, %v1283
        %v1285 = vrot.slane %v1280, %v1284
        %v1291 = vunpack.c.l.b16 %v1276
        %v1292 = vunpack.c.l.b16 %v1277
        %v1293 = vunpack.c.l.b16 %v1278
        %v1294 = vunpack.c.l.b16 %v1279
        %v1295 = vpack.c.b16 %v1292, %v1291
        %v1296 = vpack.c.b16 %v1294, %v1293
        %v1300 = vsel %vm762, %v1275, 0
        %1302 = vmatprep.subr.bf16.mxu0 0
        %1303 = vmatpush1.bf16.msra.mxu0 %v1295
        %1304 = vmatprep.subr.bf16.mxu0 0
        %1305 = vmatpush1.bf16.msra.mxu0 %v1296
        %1306 = vmatprep.subr.bf16.mxu0 0
        %1307 = vmatpush1.bf16.msra.mxu0 0
        %1308 = vmatprep.subr.bf16.mxu0 0
        %1309 = vmatpush1.bf16.msra.mxu0 0
        %1310 = vmatprep.subr.bf16.mxu0 0
        %1311 = vmatpush1.bf16.msra.mxu0 0
        %1312 = vmatprep.subr.bf16.mxu0 0
        %1313 = vmatpush1.bf16.msra.mxu0 0
        %1314 = vmatprep.subr.bf16.mxu0 0
        %1315 = vmatpush1.bf16.msra.mxu0 0
        %1316 = vmatprep.subr.bf16.mxu0 0
        %1317 = vmatpush1.bf16.msra.mxu0 0
        %1318 = vmatprep.subr.bf16.mxu0 0
        %1319 = vmatpush1.bf16.msra.mxu0 0
        %1320 = vmatprep.subr.bf16.mxu0 0
        %1321 = vmatpush1.bf16.msra.mxu0 0
        %1322 = vmatprep.subr.bf16.mxu0 0
        %1323 = vmatpush1.bf16.msra.mxu0 0
        %1324 = vmatprep.subr.bf16.mxu0 0
        %1325 = vmatpush1.bf16.msra.mxu0 0
        %1326 = vmatprep.subr.bf16.mxu0 0
        %1327 = vmatpush1.bf16.msra.mxu0 0
        %1328 = vmatprep.subr.bf16.mxu0 0
        %1329 = vmatpush1.bf16.msra.mxu0 0
        %1330 = vmatprep.subr.bf16.mxu0 0
        %1331 = vmatpush1.bf16.msra.mxu0 0
        %1332 = vmatprep.subr.bf16.mxu0 0
        %1333 = vmatpush1.bf16.msra.mxu0 0
        %1334 = vmatprep.mubr.bf16.mxu0 0
        %1335 = vmatmul.mubr.bf16.gmra.mrb[0].mxu0 %v1300
        %v1336 = vpop.f32.mrb[0].mxu0
        %v1337 = vadd.f32 %v1285, %v1336
        %v1338 = vpop.f32.mrb[0].mxu0
        %v1339 = vpop.f32.mrb[0].mxu0
        %v1340 = vpop.f32.mrb[0].mxu0
        %1341 = vdwg.mxu0
        %v1342 = vadd.f32 %v724, %v1337
        %v1343 = vpack.c.bf16 %v1342, %v1342
        %vm1344 = vcmask 257024
        %1345 = vst.msk [vmem:[%s548] sm:$0xf] %vm1344, %v1343
        %s1346 = sand.u32 %s291, 1
        %s1347 = scalar_lea.sflag [#allocation7], %s1346
        %s1348 = sand.u32 %s291, 1
        %s1349 = smul.addr %s1348, 4
        %s1350 = scalar_lea.vmem [#allocation23], %s1349
        // Predicated region
        $region113: #{tpu_custom_call.1} parent=63 // pred_check
          %p1351 = pneg %p301
        $region114: #{tpu_custom_call.1} parent=63 // pred_check_branch
          %1353 = sbr.rel (%p1351) target = $region116
        $region115: #{tpu_custom_call.1} parent=63 // pred_region
          %s1355 = ssub.s32 64, 64
          %1356 = vsyncadd %s1347, %s1355
          %s1357 = sadd.s32 %s38, %s37
          %s1358 = smul.addr %s1357, 64
          %s1359 = scalar_lea.hbm %s11, %s1358
          %s1361 = sshll.u32 %s1350, 4
          %s1362 = int_to_ptr.vmem [resolvable:$true] %s1361
          %1364 = dma.vmem_to_hbm [thread:$0]  %s1362, 64, %s1359, %s1347
        $region116: #{tpu_custom_call.1} parent=63 // pred_fallthru
          _
      $region64: #{tpu_custom_call.1} parent=5 // pred_fallthru
        _
      %p1365 = scmp.le.s32.totalorder 2, %s28
      // Predicated region
      $region117: #{tpu_custom_call.1} parent=5 // pred_check
        %p1366 = pneg %p1365
      $region118: #{tpu_custom_call.1} parent=5 // pred_check_branch
        %1368 = sbr.rel (%p1366) target = $region120
      $region119: #{tpu_custom_call.1} parent=5 // pred_region
        %s1369 = ssub.s32 %s28, 2
        // Predicated region
        $region121: #{tpu_custom_call.1} parent=119 // pred_check
          %p1370 = pneg %p307
        $region122: #{tpu_custom_call.1} parent=119 // pred_check_branch
          %1372 = sbr.rel (%p1370) target = $region124
        $region123: #{tpu_custom_call.1} parent=119 // pred_region
          %s1373 = sand.u32 %s292, 1
          %s1374 = scalar_lea.sflag [#allocation7], %s1373
          %s1375 = sand.u32 %s292, 1
          %s1376 = smul.addr %s1375, 4
          %s1377 = scalar_lea.vmem [#allocation23], %s1376
          %1378 = dma.done %s1374, 64
        $region124: #{tpu_custom_call.1} parent=119 // pred_fallthru
          _
      $region120: #{tpu_custom_call.1} parent=5 // pred_fallthru
        _
    $region6: #{tpu_custom_call.1} parent=1 // loop_footer
      %s32 = sadd.s32 1, %s28
    $region7: #{tpu_custom_call.1} parent=1 // loop_footer_branch
      %27 = sbr.rel target = $region3
    $region8: #{tpu_custom_call.1} parent=1 // loop_exit
      _
    %1379 = vsyncpa [#allocation6], 1
    %s1380 = scalar_lea.sflag [#allocation6], 1
    %1381 = vsyncpa %s1380, 1
    %1382 = vsyncpa [#allocation9], 1
    %1383 = vsyncpa [#allocation12], 1
    %1384 = vsyncpa [#allocation15], 1
    %1385 = vsyncpa [#allocation18], 1
    %1386 = vsyncpa [#allocation21], 1
    %1387 = vsyncpa [#allocation7], 1
    %s1388 = scalar_lea.sflag [#allocation7], 1
    %1389 = vsyncpa %s1388, 1

</llo_original>
